<compile_context>
chip_gen: v7x
topology: tpu7x:2x2x1
jax: 0.10.0
libtpu: 0.0.40
codegen_flags: <defaults>
</compile_context>

<pallas_src>
import jax
import jax.numpy as jnp
from jax.experimental import pallas as pl
from jax.experimental.pallas import tpu as pltpu


# ----------------------------- Pallas kernel ---------------------------------

def make_decoder_kernel(B, S, H):
    """Builds the fused LSTM + FC kernel for static (B, S, H)."""

    def kernel(x_ref, wih_ref, whh_ref, b_ref, wfc_ref, bfc_ref, out_ref, hs_sc):
        # x_ref   : (S*B, E)  time-major flattened inputs, row t*B + b
        # wih_ref : (E, 4H)   input->hidden weights, columns [i | f | g | o]
        # whh_ref : (H, 4H)   hidden->hidden weights, columns [i | f | g | o]
        # b_ref   : (1, 4H)   combined bias b_ih + b_hh (f32)
        # wfc_ref : (H, V)    final projection weights
        # bfc_ref : (1, V)    final projection bias (f32)
        # out_ref : (S*B, V)  logits, row t*B + b
        # hs_sc   : (S*B, H)  f32 scratch holding all hidden states

        # ---- hoisted, loop-invariant loads ----
        whh = whh_ref[...]                                   # (H, 4H)
        bias = b_ref[...]                                    # (1, 4H) f32

        # ---- one big lane-dense input projection for all timesteps ----
        # (S*B, E) @ (E, 4H) -> (S*B, 4H), f32 accumulation on the MXU.
        xg = jnp.dot(x_ref[...], wih_ref[...],
                     preferred_element_type=jnp.float32) + bias

        # ---- sequential recurrence; h/c carried as values (no scratch round-trip) ----
        h = jnp.zeros((B, H), jnp.float32)
        c = jnp.zeros((B, H), jnp.float32)
        for t in range(S):                                   # small static trip count
            # single fused (B, H) @ (H, 4H) gate matmul per step
            gates = xg[t * B:(t + 1) * B, :] + jnp.dot(
                h.astype(whh.dtype), whh, preferred_element_type=jnp.float32)

            i_g = jax.nn.sigmoid(gates[:, 0 * H:1 * H])
            f_g = jax.nn.sigmoid(gates[:, 1 * H:2 * H])
            g_g = jnp.tanh(gates[:, 2 * H:3 * H])
            o_g = jax.nn.sigmoid(gates[:, 3 * H:4 * H])

            c = f_g * c + i_g * g_g
            h = o_g * jnp.tanh(c)
            hs_sc[pl.ds(t * B, B), :] = h                    # only per-step store

        # ---- fused final projection on the VMEM-resident hidden states ----
        logits = jnp.dot(hs_sc[...].astype(wfc_ref.dtype), wfc_ref[...],
                         preferred_element_type=jnp.float32)
        out_ref[...] = (logits + bfc_ref[...]).astype(out_ref.dtype)

    return kernel


# ------------------------------ Python wrapper --------------------------------

def text_decoder_forward(params, features, captions, compute_dtype=jnp.float32):
    """Pallas implementation of TextDecoder.forward.

    compute_dtype=jnp.bfloat16 is the recommended setting on v6e/v7x (matmul operands in
    bf16, f32 accumulation); the default f32 is used for tight numerical checking here.
    """
    # Glue in plain JAX: embedding gather + concat of image features at position 0.
    emb = jnp.take(params["embedding"], captions, axis=0)             # (B, T, E)
    inputs = jnp.concatenate([features[:, None, :], emb], axis=1)     # (B, T+1, E)

    B, S, E = inputs.shape
    H = params["whh"].shape[0]
    V = params["w_fc"].shape[-1]

    # Time-major flat layout: row t*B + b = inputs[b, t].
    x_flat = jnp.transpose(inputs, (1, 0, 2)).reshape(S * B, E)

    cast = lambda a: a.astype(compute_dtype)
    args = (
        cast(x_flat),                       # (S*B, E)
        cast(params["wih"]),                # (E, 4H)
        cast(params["whh"]),                # (H, 4H)
        params["b_lstm"].astype(jnp.float32),   # (1, 4H)  bias stays f32
        cast(params["w_fc"]),               # (H, V)
        params["b_fc"].astype(jnp.float32),     # (1, V)   bias stays f32
    )

    itemsize = jnp.dtype(compute_dtype).itemsize
    bytes_accessed = int(
        x_flat.size * itemsize
        + params["wih"].size * itemsize
        + params["whh"].size * itemsize
        + params["b_lstm"].size * 4
        + params["w_fc"].size * itemsize
        + params["b_fc"].size * 4
        + S * B * V * 4
    )
    cost = pl.CostEstimate(
        flops=2 * S * B * (E + H) * 4 * H + 2 * S * B * H * V,
        transcendentals=5 * S * B * H,
        bytes_accessed=bytes_accessed,
    )

    logits_flat = pl.pallas_call(
        make_decoder_kernel(B, S, H),
        out_shape=jax.ShapeDtypeStruct((S * B, V), jnp.float32),
        in_specs=[
            pl.BlockSpec((S * B, E), lambda: (0, 0)),
            pl.BlockSpec((E, 4 * H), lambda: (0, 0)),
            pl.BlockSpec((H, 4 * H), lambda: (0, 0)),
            pl.BlockSpec((1, 4 * H), lambda: (0, 0)),
            pl.BlockSpec((H, V), lambda: (0, 0)),
            pl.BlockSpec((1, V), lambda: (0, 0)),
        ],
        out_specs=pl.BlockSpec((S * B, V), lambda: (0, 0)),
        scratch_shapes=[pltpu.VMEM((S * B, H), jnp.float32)],
        compiler_params=pltpu.CompilerParams(vmem_limit_bytes=32 * 1024 * 1024),
        cost_estimate=cost,
    )(*args)

    # Un-flatten: (S*B, V) -> (S, B, V) -> (B, S, V), matching batch_first=True.
    return logits_flat.reshape(S, B, V).transpose(1, 0, 2)


# ------------------------------ Pure-JAX reference ----------------------------

def text_decoder_reference(params, features, captions):
    emb = jnp.take(params["embedding"], captions, axis=0)
    x = jnp.concatenate([features[:, None, :], emb], axis=1)
    B, S, E = x.shape
    H = params["whh"].shape[0]
    h = jnp.zeros((B, H), jnp.float32)
    c = jnp.zeros((B, H), jnp.float32)
    outs = []
    for t in range(S):
        g = x[:, t, :] @ params["wih"] + h @ params["whh"] + params["b_lstm"]
        i_g = jax.nn.sigmoid(g[:, 0 * H:1 * H])
        f_g = jax.nn.sigmoid(g[:, 1 * H:2 * H])
        g_g = jnp.tanh(g[:, 2 * H:3 * H])
        o_g = jax.nn.sigmoid(g[:, 3 * H:4 * H])
        c = f_g * c + i_g * g_g
        h = o_g * jnp.tanh(c)
        outs.append(h)
    hs = jnp.stack(outs, axis=1)
    return hs @ params["w_fc"] + params["b_fc"]


# ----------------------------------- Main --------------------------------------

def init_params(key, embed_dim, hidden_dim, vocab_size):
    ks = jax.random.split(key, 6)
    scale = 0.1
    H = hidden_dim
    return {
        # nn.Embedding(vocab_size, embed_dim)
        "embedding": scale * jax.random.normal(ks[0], (vocab_size, embed_dim), jnp.float32),
        # nn.LSTM(embed_dim, hidden_dim): weights stored pre-transposed and gate-fused,
        # columns ordered [i | f | g | o] (PyTorch gate order).
        "wih": scale * jax.random.normal(ks[1], (embed_dim, 4 * H), jnp.float32),
        "whh": scale * jax.random.normal(ks[2], (H, 4 * H), jnp.float32),
        # combined bias b_ih + b_hh, kept as (1, 4H) for broadcasting.
        "b_lstm": scale * jax.random.normal(ks[3], (1, 4 * H), jnp.float32),
        # nn.Linear(hidden_dim, vocab_size), transposed to (H, V); bias (1, V).
        "w_fc": scale * jax.random.normal(ks[4], (H, vocab_size), jnp.float32),
        "b_fc": scale * jax.random.normal(ks[5], (1, vocab_size), jnp.float32),
    }


if __name__ == "__main__":
    key = jax.random.PRNGKey(0)
    k_param, k_feat, k_cap = jax.random.split(key, 3)

    batch = 2
    cap_len = 8          # captions length T; LSTM runs over T+1 = 9 steps
    embed_dim = 16
    hidden_dim = 32      # 4H = 128 -> fused gate output is exactly one vreg lane width
    vocab_size = 32

    params = init_params(k_param, embed_dim, hidden_dim, vocab_size)
    features = jax.random.normal(k_feat, (batch, embed_dim), jnp.float32)
    captions = jax.random.randint(k_cap, (batch, cap_len), 0, vocab_size, jnp.int32)

    out = text_decoder_forward(params, features, captions)
    out = jax.block_until_ready(out)

    ref = text_decoder_reference(params, features, captions)
    assert out.shape == (batch, cap_len + 1, vocab_size), out.shape
    assert jnp.allclose(out, ref, atol=1e-4, rtol=1e-4), float(jnp.max(jnp.abs(out - ref)))

    print("KERNEL_OK")
</pallas_src>

<mosaic_0001>
module attributes {stable_mosaic.version = 11 : i64} {
  func.func @kernel(%arg0: memref<18x16xf32, #tpu.memory_space<vmem>>, %arg1: memref<16x128xf32, #tpu.memory_space<vmem>>, %arg2: memref<32x128xf32, #tpu.memory_space<vmem>>, %arg3: memref<1x128xf32, #tpu.memory_space<vmem>>, %arg4: memref<32x32xf32, #tpu.memory_space<vmem>>, %arg5: memref<1x32xf32, #tpu.memory_space<vmem>>, %arg6: memref<18x32xf32, #tpu.memory_space<vmem>>, %arg7: memref<18x32xf32, #tpu.memory_space<vmem>>) attributes {dimension_semantics = [], scalar_prefetch = 0 : i64, scratch_operands = 1 : i64, tpu.core_type = #tpu.core_type<tc>} {
    %c0 = arith.constant 0 : index
    %c0_0 = arith.constant 0 : index
    %0 = vector.load %arg2[%c0, %c0_0] : memref<32x128xf32, #tpu.memory_space<vmem>>, vector<32x128xf32>
    %c0_1 = arith.constant 0 : index
    %c0_2 = arith.constant 0 : index
    %1 = vector.load %arg3[%c0_1, %c0_2] : memref<1x128xf32, #tpu.memory_space<vmem>>, vector<1x128xf32>
    %c0_3 = arith.constant 0 : index
    %c0_4 = arith.constant 0 : index
    %2 = vector.load %arg0[%c0_3, %c0_4] : memref<18x16xf32, #tpu.memory_space<vmem>>, vector<18x16xf32>
    %c0_5 = arith.constant 0 : index
    %c0_6 = arith.constant 0 : index
    %3 = vector.load %arg1[%c0_5, %c0_6] : memref<16x128xf32, #tpu.memory_space<vmem>>, vector<16x128xf32>
    %cst = arith.constant dense<0.000000e+00> : vector<18x128xf32>
    %4 = tpu.matmul %2, %3, %cst {dimension_numbers = #tpu.dot_dimension_numbers<[1], [0], [0], [1], [0, 0, 1, 1], [], []>} : vector<18x16xf32>, vector<16x128xf32>, vector<18x128xf32> -> vector<18x128xf32>
    %5 = vector.broadcast %1 : vector<1x128xf32> to vector<18x128xf32>
    %6 = arith.addf %4, %5 : vector<18x128xf32>
    %cst_7 = arith.constant 0.000000e+00 : f32
    %7 = vector.broadcast %cst_7 : f32 to vector<2x32xf32>
    %cst_8 = arith.constant 0.000000e+00 : f32
    %8 = vector.broadcast %cst_8 : f32 to vector<2x32xf32>
    %9 = vector.extract_strided_slice %6 {offsets = [0, 0], sizes = [2, 128], strides = [1, 1]} : vector<18x128xf32> to vector<2x128xf32>
    %cst_9 = arith.constant dense<0.000000e+00> : vector<2x128xf32>
    %10 = tpu.matmul %7, %0, %cst_9 {dimension_numbers = #tpu.dot_dimension_numbers<[1], [0], [0], [1], [0, 0, 1, 1], [], []>} : vector<2x32xf32>, vector<32x128xf32>, vector<2x128xf32> -> vector<2x128xf32>
    %11 = arith.addf %9, %10 : vector<2x128xf32>
    %12 = vector.extract_strided_slice %11 {offsets = [0, 0], sizes = [2, 32], strides = [1, 1]} : vector<2x128xf32> to vector<2x32xf32>
    %13 = arith.negf %12 : vector<2x32xf32>
    %14 = math.exp %13 : vector<2x32xf32>
    %cst_10 = arith.constant 1.000000e+00 : f32
    %15 = vector.broadcast %cst_10 : f32 to vector<2x32xf32>
    %16 = arith.addf %15, %14 : vector<2x32xf32>
    %17 = arith.divf %15, %16 : vector<2x32xf32>
    %18 = vector.extract_strided_slice %11 {offsets = [0, 32], sizes = [2, 32], strides = [1, 1]} : vector<2x128xf32> to vector<2x32xf32>
    %19 = arith.negf %18 : vector<2x32xf32>
    %20 = math.exp %19 : vector<2x32xf32>
    %cst_11 = arith.constant 1.000000e+00 : f32
    %21 = vector.broadcast %cst_11 : f32 to vector<2x32xf32>
    %22 = arith.addf %21, %20 : vector<2x32xf32>
    %23 = arith.divf %21, %22 : vector<2x32xf32>
    %24 = vector.extract_strided_slice %11 {offsets = [0, 64], sizes = [2, 32], strides = [1, 1]} : vector<2x128xf32> to vector<2x32xf32>
    %25 = math.tanh %24 : vector<2x32xf32>
    %26 = vector.extract_strided_slice %11 {offsets = [0, 96], sizes = [2, 32], strides = [1, 1]} : vector<2x128xf32> to vector<2x32xf32>
    %27 = arith.negf %26 : vector<2x32xf32>
    %28 = math.exp %27 : vector<2x32xf32>
    %cst_12 = arith.constant 1.000000e+00 : f32
    %29 = vector.broadcast %cst_12 : f32 to vector<2x32xf32>
    %30 = arith.addf %29, %28 : vector<2x32xf32>
    %31 = arith.divf %29, %30 : vector<2x32xf32>
    %32 = arith.mulf %23, %8 : vector<2x32xf32>
    %33 = arith.mulf %17, %25 : vector<2x32xf32>
    %34 = arith.addf %32, %33 : vector<2x32xf32>
    %35 = math.tanh %34 : vector<2x32xf32>
    %36 = arith.mulf %31, %35 : vector<2x32xf32>
    %c0_13 = arith.constant 0 : index
    %c0_14 = arith.constant 0 : index
    %37 = vector.load %arg7[%c0_13, %c0_14] : memref<18x32xf32, #tpu.memory_space<vmem>>, vector<2x32xf32>
    tpu.vector_store %arg7[%c0_13, %c0_14], %36 {strides = array<i32>} : memref<18x32xf32, #tpu.memory_space<vmem>>, vector<2x32xf32>,
    %38 = vector.extract_strided_slice %6 {offsets = [2, 0], sizes = [2, 128], strides = [1, 1]} : vector<18x128xf32> to vector<2x128xf32>
    %cst_15 = arith.constant dense<0.000000e+00> : vector<2x128xf32>
    %39 = tpu.matmul %36, %0, %cst_15 {dimension_numbers = #tpu.dot_dimension_numbers<[1], [0], [0], [1], [0, 0, 1, 1], [], []>} : vector<2x32xf32>, vector<32x128xf32>, vector<2x128xf32> -> vector<2x128xf32>
    %40 = arith.addf %38, %39 : vector<2x128xf32>
    %41 = vector.extract_strided_slice %40 {offsets = [0, 0], sizes = [2, 32], strides = [1, 1]} : vector<2x128xf32> to vector<2x32xf32>
    %42 = arith.negf %41 : vector<2x32xf32>
    %43 = math.exp %42 : vector<2x32xf32>
    %cst_16 = arith.constant 1.000000e+00 : f32
    %44 = vector.broadcast %cst_16 : f32 to vector<2x32xf32>
    %45 = arith.addf %44, %43 : vector<2x32xf32>
    %46 = arith.divf %44, %45 : vector<2x32xf32>
    %47 = vector.extract_strided_slice %40 {offsets = [0, 32], sizes = [2, 32], strides = [1, 1]} : vector<2x128xf32> to vector<2x32xf32>
    %48 = arith.negf %47 : vector<2x32xf32>
    %49 = math.exp %48 : vector<2x32xf32>
    %cst_17 = arith.constant 1.000000e+00 : f32
    %50 = vector.broadcast %cst_17 : f32 to vector<2x32xf32>
    %51 = arith.addf %50, %49 : vector<2x32xf32>
    %52 = arith.divf %50, %51 : vector<2x32xf32>
    %53 = vector.extract_strided_slice %40 {offsets = [0, 64], sizes = [2, 32], strides = [1, 1]} : vector<2x128xf32> to vector<2x32xf32>
    %54 = math.tanh %53 : vector<2x32xf32>
    %55 = vector.extract_strided_slice %40 {offsets = [0, 96], sizes = [2, 32], strides = [1, 1]} : vector<2x128xf32> to vector<2x32xf32>
    %56 = arith.negf %55 : vector<2x32xf32>
    %57 = math.exp %56 : vector<2x32xf32>
    %cst_18 = arith.constant 1.000000e+00 : f32
    %58 = vector.broadcast %cst_18 : f32 to vector<2x32xf32>
    %59 = arith.addf %58, %57 : vector<2x32xf32>
    %60 = arith.divf %58, %59 : vector<2x32xf32>
    %61 = arith.mulf %52, %34 : vector<2x32xf32>
    %62 = arith.mulf %46, %54 : vector<2x32xf32>
    %63 = arith.addf %61, %62 : vector<2x32xf32>
    %64 = math.tanh %63 : vector<2x32xf32>
    %65 = arith.mulf %60, %64 : vector<2x32xf32>
    %c2 = arith.constant 2 : index
    %c0_19 = arith.constant 0 : index
    %66 = vector.load %arg7[%c2, %c0_19] : memref<18x32xf32, #tpu.memory_space<vmem>>, vector<2x32xf32>
    tpu.vector_store %arg7[%c2, %c0_19], %65 {strides = array<i32>} : memref<18x32xf32, #tpu.memory_space<vmem>>, vector<2x32xf32>,
    %67 = vector.extract_strided_slice %6 {offsets = [4, 0], sizes = [2, 128], strides = [1, 1]} : vector<18x128xf32> to vector<2x128xf32>
    %cst_20 = arith.constant dense<0.000000e+00> : vector<2x128xf32>
    %68 = tpu.matmul %65, %0, %cst_20 {dimension_numbers = #tpu.dot_dimension_numbers<[1], [0], [0], [1], [0, 0, 1, 1], [], []>} : vector<2x32xf32>, vector<32x128xf32>, vector<2x128xf32> -> vector<2x128xf32>
    %69 = arith.addf %67, %68 : vector<2x128xf32>
    %70 = vector.extract_strided_slice %69 {offsets = [0, 0], sizes = [2, 32], strides = [1, 1]} : vector<2x128xf32> to vector<2x32xf32>
    %71 = arith.negf %70 : vector<2x32xf32>
    %72 = math.exp %71 : vector<2x32xf32>
    %cst_21 = arith.constant 1.000000e+00 : f32
    %73 = vector.broadcast %cst_21 : f32 to vector<2x32xf32>
    %74 = arith.addf %73, %72 : vector<2x32xf32>
    %75 = arith.divf %73, %74 : vector<2x32xf32>
    %76 = vector.extract_strided_slice %69 {offsets = [0, 32], sizes = [2, 32], strides = [1, 1]} : vector<2x128xf32> to vector<2x32xf32>
    %77 = arith.negf %76 : vector<2x32xf32>
    %78 = math.exp %77 : vector<2x32xf32>
    %cst_22 = arith.constant 1.000000e+00 : f32
    %79 = vector.broadcast %cst_22 : f32 to vector<2x32xf32>
    %80 = arith.addf %79, %78 : vector<2x32xf32>
    %81 = arith.divf %79, %80 : vector<2x32xf32>
    %82 = vector.extract_strided_slice %69 {offsets = [0, 64], sizes = [2, 32], strides = [1, 1]} : vector<2x128xf32> to vector<2x32xf32>
    %83 = math.tanh %82 : vector<2x32xf32>
    %84 = vector.extract_strided_slice %69 {offsets = [0, 96], sizes = [2, 32], strides = [1, 1]} : vector<2x128xf32> to vector<2x32xf32>
    %85 = arith.negf %84 : vector<2x32xf32>
    %86 = math.exp %85 : vector<2x32xf32>
    %cst_23 = arith.constant 1.000000e+00 : f32
    %87 = vector.broadcast %cst_23 : f32 to vector<2x32xf32>
    %88 = arith.addf %87, %86 : vector<2x32xf32>
    %89 = arith.divf %87, %88 : vector<2x32xf32>
    %90 = arith.mulf %81, %63 : vector<2x32xf32>
    %91 = arith.mulf %75, %83 : vector<2x32xf32>
    %92 = arith.addf %90, %91 : vector<2x32xf32>
    %93 = math.tanh %92 : vector<2x32xf32>
    %94 = arith.mulf %89, %93 : vector<2x32xf32>
    %c4 = arith.constant 4 : index
    %c0_24 = arith.constant 0 : index
    %95 = vector.load %arg7[%c4, %c0_24] : memref<18x32xf32, #tpu.memory_space<vmem>>, vector<2x32xf32>
    tpu.vector_store %arg7[%c4, %c0_24], %94 {strides = array<i32>} : memref<18x32xf32, #tpu.memory_space<vmem>>, vector<2x32xf32>,
    %96 = vector.extract_strided_slice %6 {offsets = [6, 0], sizes = [2, 128], strides = [1, 1]} : vector<18x128xf32> to vector<2x128xf32>
    %cst_25 = arith.constant dense<0.000000e+00> : vector<2x128xf32>
    %97 = tpu.matmul %94, %0, %cst_25 {dimension_numbers = #tpu.dot_dimension_numbers<[1], [0], [0], [1], [0, 0, 1, 1], [], []>} : vector<2x32xf32>, vector<32x128xf32>, vector<2x128xf32> -> vector<2x128xf32>
    %98 = arith.addf %96, %97 : vector<2x128xf32>
    %99 = vector.extract_strided_slice %98 {offsets = [0, 0], sizes = [2, 32], strides = [1, 1]} : vector<2x128xf32> to vector<2x32xf32>
    %100 = arith.negf %99 : vector<2x32xf32>
    %101 = math.exp %100 : vector<2x32xf32>
    %cst_26 = arith.constant 1.000000e+00 : f32
    %102 = vector.broadcast %cst_26 : f32 to vector<2x32xf32>
    %103 = arith.addf %102, %101 : vector<2x32xf32>
    %104 = arith.divf %102, %103 : vector<2x32xf32>
    %105 = vector.extract_strided_slice %98 {offsets = [0, 32], sizes = [2, 32], strides = [1, 1]} : vector<2x128xf32> to vector<2x32xf32>
    %106 = arith.negf %105 : vector<2x32xf32>
    %107 = math.exp %106 : vector<2x32xf32>
    %cst_27 = arith.constant 1.000000e+00 : f32
    %108 = vector.broadcast %cst_27 : f32 to vector<2x32xf32>
    %109 = arith.addf %108, %107 : vector<2x32xf32>
    %110 = arith.divf %108, %109 : vector<2x32xf32>
    %111 = vector.extract_strided_slice %98 {offsets = [0, 64], sizes = [2, 32], strides = [1, 1]} : vector<2x128xf32> to vector<2x32xf32>
    %112 = math.tanh %111 : vector<2x32xf32>
    %113 = vector.extract_strided_slice %98 {offsets = [0, 96], sizes = [2, 32], strides = [1, 1]} : vector<2x128xf32> to vector<2x32xf32>
    %114 = arith.negf %113 : vector<2x32xf32>
    %115 = math.exp %114 : vector<2x32xf32>
    %cst_28 = arith.constant 1.000000e+00 : f32
    %116 = vector.broadcast %cst_28 : f32 to vector<2x32xf32>
    %117 = arith.addf %116, %115 : vector<2x32xf32>
    %118 = arith.divf %116, %117 : vector<2x32xf32>
    %119 = arith.mulf %110, %92 : vector<2x32xf32>
    %120 = arith.mulf %104, %112 : vector<2x32xf32>
    %121 = arith.addf %119, %120 : vector<2x32xf32>
    %122 = math.tanh %121 : vector<2x32xf32>
    %123 = arith.mulf %118, %122 : vector<2x32xf32>
    %c6 = arith.constant 6 : index
    %c0_29 = arith.constant 0 : index
    %124 = vector.load %arg7[%c6, %c0_29] : memref<18x32xf32, #tpu.memory_space<vmem>>, vector<2x32xf32>
    tpu.vector_store %arg7[%c6, %c0_29], %123 {strides = array<i32>} : memref<18x32xf32, #tpu.memory_space<vmem>>, vector<2x32xf32>,
    %125 = vector.extract_strided_slice %6 {offsets = [8, 0], sizes = [2, 128], strides = [1, 1]} : vector<18x128xf32> to vector<2x128xf32>
    %cst_30 = arith.constant dense<0.000000e+00> : vector<2x128xf32>
    %126 = tpu.matmul %123, %0, %cst_30 {dimension_numbers = #tpu.dot_dimension_numbers<[1], [0], [0], [1], [0, 0, 1, 1], [], []>} : vector<2x32xf32>, vector<32x128xf32>, vector<2x128xf32> -> vector<2x128xf32>
    %127 = arith.addf %125, %126 : vector<2x128xf32>
    %128 = vector.extract_strided_slice %127 {offsets = [0, 0], sizes = [2, 32], strides = [1, 1]} : vector<2x128xf32> to vector<2x32xf32>
    %129 = arith.negf %128 : vector<2x32xf32>
    %130 = math.exp %129 : vector<2x32xf32>
    %cst_31 = arith.constant 1.000000e+00 : f32
    %131 = vector.broadcast %cst_31 : f32 to vector<2x32xf32>
    %132 = arith.addf %131, %130 : vector<2x32xf32>
    %133 = arith.divf %131, %132 : vector<2x32xf32>
    %134 = vector.extract_strided_slice %127 {offsets = [0, 32], sizes = [2, 32], strides = [1, 1]} : vector<2x128xf32> to vector<2x32xf32>
    %135 = arith.negf %134 : vector<2x32xf32>
    %136 = math.exp %135 : vector<2x32xf32>
    %cst_32 = arith.constant 1.000000e+00 : f32
    %137 = vector.broadcast %cst_32 : f32 to vector<2x32xf32>
    %138 = arith.addf %137, %136 : vector<2x32xf32>
    %139 = arith.divf %137, %138 : vector<2x32xf32>
    %140 = vector.extract_strided_slice %127 {offsets = [0, 64], sizes = [2, 32], strides = [1, 1]} : vector<2x128xf32> to vector<2x32xf32>
    %141 = math.tanh %140 : vector<2x32xf32>
    %142 = vector.extract_strided_slice %127 {offsets = [0, 96], sizes = [2, 32], strides = [1, 1]} : vector<2x128xf32> to vector<2x32xf32>
    %143 = arith.negf %142 : vector<2x32xf32>
    %144 = math.exp %143 : vector<2x32xf32>
    %cst_33 = arith.constant 1.000000e+00 : f32
    %145 = vector.broadcast %cst_33 : f32 to vector<2x32xf32>
    %146 = arith.addf %145, %144 : vector<2x32xf32>
    %147 = arith.divf %145, %146 : vector<2x32xf32>
    %148 = arith.mulf %139, %121 : vector<2x32xf32>
    %149 = arith.mulf %133, %141 : vector<2x32xf32>
    %150 = arith.addf %148, %149 : vector<2x32xf32>
    %151 = math.tanh %150 : vector<2x32xf32>
    %152 = arith.mulf %147, %151 : vector<2x32xf32>
    %c8 = arith.constant 8 : index
    %c0_34 = arith.constant 0 : index
    %153 = vector.load %arg7[%c8, %c0_34] : memref<18x32xf32, #tpu.memory_space<vmem>>, vector<2x32xf32>
    tpu.vector_store %arg7[%c8, %c0_34], %152 {strides = array<i32>} : memref<18x32xf32, #tpu.memory_space<vmem>>, vector<2x32xf32>,
    %154 = vector.extract_strided_slice %6 {offsets = [10, 0], sizes = [2, 128], strides = [1, 1]} : vector<18x128xf32> to vector<2x128xf32>
    %cst_35 = arith.constant dense<0.000000e+00> : vector<2x128xf32>
    %155 = tpu.matmul %152, %0, %cst_35 {dimension_numbers = #tpu.dot_dimension_numbers<[1], [0], [0], [1], [0, 0, 1, 1], [], []>} : vector<2x32xf32>, vector<32x128xf32>, vector<2x128xf32> -> vector<2x128xf32>
    %156 = arith.addf %154, %155 : vector<2x128xf32>
    %157 = vector.extract_strided_slice %156 {offsets = [0, 0], sizes = [2, 32], strides = [1, 1]} : vector<2x128xf32> to vector<2x32xf32>
    %158 = arith.negf %157 : vector<2x32xf32>
    %159 = math.exp %158 : vector<2x32xf32>
    %cst_36 = arith.constant 1.000000e+00 : f32
    %160 = vector.broadcast %cst_36 : f32 to vector<2x32xf32>
    %161 = arith.addf %160, %159 : vector<2x32xf32>
    %162 = arith.divf %160, %161 : vector<2x32xf32>
    %163 = vector.extract_strided_slice %156 {offsets = [0, 32], sizes = [2, 32], strides = [1, 1]} : vector<2x128xf32> to vector<2x32xf32>
    %164 = arith.negf %163 : vector<2x32xf32>
    %165 = math.exp %164 : vector<2x32xf32>
    %cst_37 = arith.constant 1.000000e+00 : f32
    %166 = vector.broadcast %cst_37 : f32 to vector<2x32xf32>
    %167 = arith.addf %166, %165 : vector<2x32xf32>
    %168 = arith.divf %166, %167 : vector<2x32xf32>
    %169 = vector.extract_strided_slice %156 {offsets = [0, 64], sizes = [2, 32], strides = [1, 1]} : vector<2x128xf32> to vector<2x32xf32>
    %170 = math.tanh %169 : vector<2x32xf32>
    %171 = vector.extract_strided_slice %156 {offsets = [0, 96], sizes = [2, 32], strides = [1, 1]} : vector<2x128xf32> to vector<2x32xf32>
    %172 = arith.negf %171 : vector<2x32xf32>
    %173 = math.exp %172 : vector<2x32xf32>
    %cst_38 = arith.constant 1.000000e+00 : f32
    %174 = vector.broadcast %cst_38 : f32 to vector<2x32xf32>
    %175 = arith.addf %174, %173 : vector<2x32xf32>
    %176 = arith.divf %174, %175 : vector<2x32xf32>
    %177 = arith.mulf %168, %150 : vector<2x32xf32>
    %178 = arith.mulf %162, %170 : vector<2x32xf32>
    %179 = arith.addf %177, %178 : vector<2x32xf32>
    %180 = math.tanh %179 : vector<2x32xf32>
    %181 = arith.mulf %176, %180 : vector<2x32xf32>
    %c10 = arith.constant 10 : index
    %c0_39 = arith.constant 0 : index
    %182 = vector.load %arg7[%c10, %c0_39] : memref<18x32xf32, #tpu.memory_space<vmem>>, vector<2x32xf32>
    tpu.vector_store %arg7[%c10, %c0_39], %181 {strides = array<i32>} : memref<18x32xf32, #tpu.memory_space<vmem>>, vector<2x32xf32>,
    %183 = vector.extract_strided_slice %6 {offsets = [12, 0], sizes = [2, 128], strides = [1, 1]} : vector<18x128xf32> to vector<2x128xf32>
    %cst_40 = arith.constant dense<0.000000e+00> : vector<2x128xf32>
    %184 = tpu.matmul %181, %0, %cst_40 {dimension_numbers = #tpu.dot_dimension_numbers<[1], [0], [0], [1], [0, 0, 1, 1], [], []>} : vector<2x32xf32>, vector<32x128xf32>, vector<2x128xf32> -> vector<2x128xf32>
    %185 = arith.addf %183, %184 : vector<2x128xf32>
    %186 = vector.extract_strided_slice %185 {offsets = [0, 0], sizes = [2, 32], strides = [1, 1]} : vector<2x128xf32> to vector<2x32xf32>
    %187 = arith.negf %186 : vector<2x32xf32>
    %188 = math.exp %187 : vector<2x32xf32>
    %cst_41 = arith.constant 1.000000e+00 : f32
    %189 = vector.broadcast %cst_41 : f32 to vector<2x32xf32>
    %190 = arith.addf %189, %188 : vector<2x32xf32>
    %191 = arith.divf %189, %190 : vector<2x32xf32>
    %192 = vector.extract_strided_slice %185 {offsets = [0, 32], sizes = [2, 32], strides = [1, 1]} : vector<2x128xf32> to vector<2x32xf32>
    %193 = arith.negf %192 : vector<2x32xf32>
    %194 = math.exp %193 : vector<2x32xf32>
    %cst_42 = arith.constant 1.000000e+00 : f32
    %195 = vector.broadcast %cst_42 : f32 to vector<2x32xf32>
    %196 = arith.addf %195, %194 : vector<2x32xf32>
    %197 = arith.divf %195, %196 : vector<2x32xf32>
    %198 = vector.extract_strided_slice %185 {offsets = [0, 64], sizes = [2, 32], strides = [1, 1]} : vector<2x128xf32> to vector<2x32xf32>
    %199 = math.tanh %198 : vector<2x32xf32>
    %200 = vector.extract_strided_slice %185 {offsets = [0, 96], sizes = [2, 32], strides = [1, 1]} : vector<2x128xf32> to vector<2x32xf32>
    %201 = arith.negf %200 : vector<2x32xf32>
    %202 = math.exp %201 : vector<2x32xf32>
    %cst_43 = arith.constant 1.000000e+00 : f32
    %203 = vector.broadcast %cst_43 : f32 to vector<2x32xf32>
    %204 = arith.addf %203, %202 : vector<2x32xf32>
    %205 = arith.divf %203, %204 : vector<2x32xf32>
    %206 = arith.mulf %197, %179 : vector<2x32xf32>
    %207 = arith.mulf %191, %199 : vector<2x32xf32>
    %208 = arith.addf %206, %207 : vector<2x32xf32>
    %209 = math.tanh %208 : vector<2x32xf32>
    %210 = arith.mulf %205, %209 : vector<2x32xf32>
    %c12 = arith.constant 12 : index
    %c0_44 = arith.constant 0 : index
    %211 = vector.load %arg7[%c12, %c0_44] : memref<18x32xf32, #tpu.memory_space<vmem>>, vector<2x32xf32>
    tpu.vector_store %arg7[%c12, %c0_44], %210 {strides = array<i32>} : memref<18x32xf32, #tpu.memory_space<vmem>>, vector<2x32xf32>,
    %212 = vector.extract_strided_slice %6 {offsets = [14, 0], sizes = [2, 128], strides = [1, 1]} : vector<18x128xf32> to vector<2x128xf32>
    %cst_45 = arith.constant dense<0.000000e+00> : vector<2x128xf32>
    %213 = tpu.matmul %210, %0, %cst_45 {dimension_numbers = #tpu.dot_dimension_numbers<[1], [0], [0], [1], [0, 0, 1, 1], [], []>} : vector<2x32xf32>, vector<32x128xf32>, vector<2x128xf32> -> vector<2x128xf32>
    %214 = arith.addf %212, %213 : vector<2x128xf32>
    %215 = vector.extract_strided_slice %214 {offsets = [0, 0], sizes = [2, 32], strides = [1, 1]} : vector<2x128xf32> to vector<2x32xf32>
    %216 = arith.negf %215 : vector<2x32xf32>
    %217 = math.exp %216 : vector<2x32xf32>
    %cst_46 = arith.constant 1.000000e+00 : f32
    %218 = vector.broadcast %cst_46 : f32 to vector<2x32xf32>
    %219 = arith.addf %218, %217 : vector<2x32xf32>
    %220 = arith.divf %218, %219 : vector<2x32xf32>
    %221 = vector.extract_strided_slice %214 {offsets = [0, 32], sizes = [2, 32], strides = [1, 1]} : vector<2x128xf32> to vector<2x32xf32>
    %222 = arith.negf %221 : vector<2x32xf32>
    %223 = math.exp %222 : vector<2x32xf32>
    %cst_47 = arith.constant 1.000000e+00 : f32
    %224 = vector.broadcast %cst_47 : f32 to vector<2x32xf32>
    %225 = arith.addf %224, %223 : vector<2x32xf32>
    %226 = arith.divf %224, %225 : vector<2x32xf32>
    %227 = vector.extract_strided_slice %214 {offsets = [0, 64], sizes = [2, 32], strides = [1, 1]} : vector<2x128xf32> to vector<2x32xf32>
    %228 = math.tanh %227 : vector<2x32xf32>
    %229 = vector.extract_strided_slice %214 {offsets = [0, 96], sizes = [2, 32], strides = [1, 1]} : vector<2x128xf32> to vector<2x32xf32>
    %230 = arith.negf %229 : vector<2x32xf32>
    %231 = math.exp %230 : vector<2x32xf32>
    %cst_48 = arith.constant 1.000000e+00 : f32
    %232 = vector.broadcast %cst_48 : f32 to vector<2x32xf32>
    %233 = arith.addf %232, %231 : vector<2x32xf32>
    %234 = arith.divf %232, %233 : vector<2x32xf32>
    %235 = arith.mulf %226, %208 : vector<2x32xf32>
    %236 = arith.mulf %220, %228 : vector<2x32xf32>
    %237 = arith.addf %235, %236 : vector<2x32xf32>
    %238 = math.tanh %237 : vector<2x32xf32>
    %239 = arith.mulf %234, %238 : vector<2x32xf32>
    %c14 = arith.constant 14 : index
    %c0_49 = arith.constant 0 : index
    %240 = vector.load %arg7[%c14, %c0_49] : memref<18x32xf32, #tpu.memory_space<vmem>>, vector<2x32xf32>
    tpu.vector_store %arg7[%c14, %c0_49], %239 {strides = array<i32>} : memref<18x32xf32, #tpu.memory_space<vmem>>, vector<2x32xf32>,
    %241 = vector.extract_strided_slice %6 {offsets = [16, 0], sizes = [2, 128], strides = [1, 1]} : vector<18x128xf32> to vector<2x128xf32>
    %cst_50 = arith.constant dense<0.000000e+00> : vector<2x128xf32>
    %242 = tpu.matmul %239, %0, %cst_50 {dimension_numbers = #tpu.dot_dimension_numbers<[1], [0], [0], [1], [0, 0, 1, 1], [], []>} : vector<2x32xf32>, vector<32x128xf32>, vector<2x128xf32> -> vector<2x128xf32>
    %243 = arith.addf %241, %242 : vector<2x128xf32>
    %244 = vector.extract_strided_slice %243 {offsets = [0, 0], sizes = [2, 32], strides = [1, 1]} : vector<2x128xf32> to vector<2x32xf32>
    %245 = arith.negf %244 : vector<2x32xf32>
    %246 = math.exp %245 : vector<2x32xf32>
    %cst_51 = arith.constant 1.000000e+00 : f32
    %247 = vector.broadcast %cst_51 : f32 to vector<2x32xf32>
    %248 = arith.addf %247, %246 : vector<2x32xf32>
    %249 = arith.divf %247, %248 : vector<2x32xf32>
    %250 = vector.extract_strided_slice %243 {offsets = [0, 32], sizes = [2, 32], strides = [1, 1]} : vector<2x128xf32> to vector<2x32xf32>
    %251 = arith.negf %250 : vector<2x32xf32>
    %252 = math.exp %251 : vector<2x32xf32>
    %cst_52 = arith.constant 1.000000e+00 : f32
    %253 = vector.broadcast %cst_52 : f32 to vector<2x32xf32>
    %254 = arith.addf %253, %252 : vector<2x32xf32>
    %255 = arith.divf %253, %254 : vector<2x32xf32>
    %256 = vector.extract_strided_slice %243 {offsets = [0, 64], sizes = [2, 32], strides = [1, 1]} : vector<2x128xf32> to vector<2x32xf32>
    %257 = math.tanh %256 : vector<2x32xf32>
    %258 = vector.extract_strided_slice %243 {offsets = [0, 96], sizes = [2, 32], strides = [1, 1]} : vector<2x128xf32> to vector<2x32xf32>
    %259 = arith.negf %258 : vector<2x32xf32>
    %260 = math.exp %259 : vector<2x32xf32>
    %cst_53 = arith.constant 1.000000e+00 : f32
    %261 = vector.broadcast %cst_53 : f32 to vector<2x32xf32>
    %262 = arith.addf %261, %260 : vector<2x32xf32>
    %263 = arith.divf %261, %262 : vector<2x32xf32>
    %264 = arith.mulf %255, %237 : vector<2x32xf32>
    %265 = arith.mulf %249, %257 : vector<2x32xf32>
    %266 = arith.addf %264, %265 : vector<2x32xf32>
    %267 = math.tanh %266 : vector<2x32xf32>
    %268 = arith.mulf %263, %267 : vector<2x32xf32>
    %c16 = arith.constant 16 : index
    %c0_54 = arith.constant 0 : index
    %269 = vector.load %arg7[%c16, %c0_54] : memref<18x32xf32, #tpu.memory_space<vmem>>, vector<2x32xf32>
    tpu.vector_store %arg7[%c16, %c0_54], %268 {strides = array<i32>} : memref<18x32xf32, #tpu.memory_space<vmem>>, vector<2x32xf32>,
    %c0_55 = arith.constant 0 : index
    %c0_56 = arith.constant 0 : index
    %270 = vector.load %arg7[%c0_55, %c0_56] : memref<18x32xf32, #tpu.memory_space<vmem>>, vector<18x32xf32>
    %c0_57 = arith.constant 0 : index
    %c0_58 = arith.constant 0 : index
    %271 = vector.load %arg4[%c0_57, %c0_58] : memref<32x32xf32, #tpu.memory_space<vmem>>, vector<32x32xf32>
    %cst_59 = arith.constant dense<0.000000e+00> : vector<18x32xf32>
    %272 = tpu.matmul %270, %271, %cst_59 {dimension_numbers = #tpu.dot_dimension_numbers<[1], [0], [0], [1], [0, 0, 1, 1], [], []>} : vector<18x32xf32>, vector<32x32xf32>, vector<18x32xf32> -> vector<18x32xf32>
    %c0_60 = arith.constant 0 : index
    %c0_61 = arith.constant 0 : index
    %273 = vector.load %arg5[%c0_60, %c0_61] : memref<1x32xf32, #tpu.memory_space<vmem>>, vector<1x32xf32>
    %274 = vector.broadcast %273 : vector<1x32xf32> to vector<18x32xf32>
    %275 = arith.addf %272, %274 : vector<18x32xf32>
    %c0_62 = arith.constant 0 : index
    %c0_63 = arith.constant 0 : index
    %276 = vector.load %arg6[%c0_62, %c0_63] : memref<18x32xf32, #tpu.memory_space<vmem>>, vector<18x32xf32>
    tpu.vector_store %arg6[%c0_62, %c0_63], %275 {strides = array<i32>} : memref<18x32xf32, #tpu.memory_space<vmem>>, vector<18x32xf32>,
    return
  }
}

</mosaic_0001>

<llo_original>
// kernel: tpu_custom_call.1
$region0: #{tpu_custom_call.1}
  #allocation0 [shape = 'u32[]', space=smem, size = 0x4, offset = 0x4, fixed_abs, tag = 'smem constant byte address 0x4 - core index']
  #allocation1 [shape = 'u32[144,128]{1,0:T(1,128)}', space=vmem, size = 0x12000, scoped, tag = 'internal scratch']
  #allocation2 [shape = 'f32[18,32]{1,0:T(8,128)}', space=vmem, size = 0x3000, scoped, tag = 'scratch operand']
  %s0 = inlined_call_operand.vmem [shape: f32[18,16], index: 0, kind: input, shape index: {}]
  %s1 = inlined_call_operand.hbm [shape: f32[16,128], index: 1, kind: input, shape index: {}]
  %s2 = inlined_call_operand.vmem [shape: f32[32,128], index: 2, kind: input, shape index: {}]
  %s3 = inlined_call_operand.vmem [shape: f32[1,128], index: 3, kind: input, shape index: {}]
  %s4 = inlined_call_operand.hbm [shape: f32[32,32], index: 4, kind: input, shape index: {}]
  %s5 = inlined_call_operand.vmem [shape: f32[1,32], index: 5, kind: input, shape index: {}]
  %s6 = inlined_call_operand.hbm [shape: f32[18,32], index: 6, kind: output, shape index: {}]
  %s7 = sld [smem:[#allocation0]]
  $region42: #{tpu_custom_call.1} parent=0
    _
  %s9 = ssub.s32 1, %s7
  %s10 = scalar_select 0, %s9, %s7
  $region1: #{tpu_custom_call.1} parent=0
    #allocation3 [shape = 'u8[8192]{0}', space=vmem, size = 0x2000, scoped, tag = 'input window, operand 1, single buffered']
    #allocation4 [shape = 's32[1]{0}', space=sflag, size = 0x4, scoped, tag = 'scoped memory for tpu_custom_call.1']
    #allocation5 [shape = 's32[1]{0}', space=sflag, size = 0x4, scoped, tag = 'scoped memory for tpu_custom_call.1']
    #allocation6 [shape = 'u8[16384]{0}', space=vmem, size = 0x4000, scoped, tag = 'input window, operand 4, single buffered']
    #allocation7 [shape = 's32[1]{0}', space=sflag, size = 0x4, scoped, tag = 'scoped memory for tpu_custom_call.1']
    #allocation8 [shape = 'u8[12288]{0}', space=vmem, size = 0x3000, scoped, tag = 'output window, operand 0, single buffered']
    %11 = vsyncpa [#allocation4], 0
    %12 = vsyncpa [#allocation7], 0
    %13 = vsyncpa [#allocation5], 0
    // Predicated region
    $region2: #{tpu_custom_call.1} parent=1 // pred_check
      _
    $region3: #{tpu_custom_call.1} parent=1 // pred_check_branch
      %15 = sbr.rel (0) target = $region5
    $region4: #{tpu_custom_call.1} parent=1 // pred_region
      _
    $region5: #{tpu_custom_call.1} parent=1 // pred_fallthru
      _
    // Predicated region
    $region6: #{tpu_custom_call.1} parent=1 // pred_check
      _
    $region7: #{tpu_custom_call.1} parent=1 // pred_check_branch
      %17 = sbr.rel (0) target = $region9
    $region8: #{tpu_custom_call.1} parent=1 // pred_region
      %s19 = ssub.s32 256, 256
      %20 = vsyncadd [#allocation4], %s19
      %s21 = sshll.u32 [#allocation3], 4
      %s22 = int_to_ptr.vmem [resolvable:$true] %s21
      %27 = dma.hbm_to_vmem [thread:$0]  %s1, 256, %s22, [#allocation4], 128, 128, 8
    $region9: #{tpu_custom_call.1} parent=1 // pred_fallthru
      _
    // Predicated region
    $region10: #{tpu_custom_call.1} parent=1 // pred_check
      _
    $region11: #{tpu_custom_call.1} parent=1 // pred_check_branch
      %29 = sbr.rel (0) target = $region13
    $region12: #{tpu_custom_call.1} parent=1 // pred_region
      _
    $region13: #{tpu_custom_call.1} parent=1 // pred_fallthru
      _
    // Predicated region
    $region14: #{tpu_custom_call.1} parent=1 // pred_check
      _
    $region15: #{tpu_custom_call.1} parent=1 // pred_check_branch
      %31 = sbr.rel (0) target = $region17
    $region16: #{tpu_custom_call.1} parent=1 // pred_region
      _
    $region17: #{tpu_custom_call.1} parent=1 // pred_fallthru
      _
    // Predicated region
    $region18: #{tpu_custom_call.1} parent=1 // pred_check
      _
    $region19: #{tpu_custom_call.1} parent=1 // pred_check_branch
      %33 = sbr.rel (0) target = $region21
    $region20: #{tpu_custom_call.1} parent=1 // pred_region
      %s35 = ssub.s32 512, 512
      %36 = vsyncadd [#allocation7], %s35
      %s37 = sshll.u32 [#allocation6], 4
      %s38 = int_to_ptr.vmem [resolvable:$true] %s37
      %43 = dma.hbm_to_vmem [thread:$0]  %s4, 512, %s38, [#allocation7], 128, 128, 8
    $region21: #{tpu_custom_call.1} parent=1 // pred_fallthru
      _
    // Predicated region
    $region22: #{tpu_custom_call.1} parent=1 // pred_check
      _
    $region23: #{tpu_custom_call.1} parent=1 // pred_check_branch
      %45 = sbr.rel (0) target = $region25
    $region24: #{tpu_custom_call.1} parent=1 // pred_region
      _
    $region25: #{tpu_custom_call.1} parent=1 // pred_fallthru
      _
    // Predicated region
    $region26: #{tpu_custom_call.1} parent=1 // pred_check
      _
    $region27: #{tpu_custom_call.1} parent=1 // pred_check_branch
      %47 = sbr.rel (0) target = $region29
    $region28: #{tpu_custom_call.1} parent=1 // pred_region
      %48 = dma.done [#allocation4], 256
    $region29: #{tpu_custom_call.1} parent=1 // pred_fallthru
      _
    // Predicated region
    $region30: #{tpu_custom_call.1} parent=1 // pred_check
      _
    $region31: #{tpu_custom_call.1} parent=1 // pred_check_branch
      %50 = sbr.rel (0) target = $region33
    $region32: #{tpu_custom_call.1} parent=1 // pred_region
      %51 = dma.done [#allocation7], 512
    $region33: #{tpu_custom_call.1} parent=1 // pred_fallthru
      _
    %v52 = vld [vmem:[%s2] sm:$0xff]
    %v53 = vld [vmem:[%s2 + $0x8] sm:$0xff]
    %v54 = vld [vmem:[%s2 + $0x10] sm:$0xff]
    %v55 = vld [vmem:[%s2 + $0x18] sm:$0xff]
    %v56 = vld [vmem:[%s3] sm:$0x1]
    %v57 = vld [vmem:[%s0] sm:$0xff]
    %v58 = vld [vmem:[%s0 + $0x8] sm:$0xff]
    %v59 = vld [vmem:[%s0 + $0x10] sm:$0x3]
    %v60 = vld [vmem:[#allocation3] sm:$0xff]
    %v61 = vld [vmem:[#allocation3 + $0x8] sm:$0xff]
    %v63 = vlaneseq
    %v64 = vshrl.u32 %v63, 7
    %v65 = vsub.s32 0, %v64
    %v66 = vrot.slane %v56, %v65
    %vm68 = vcmask 130048
    %v70 = vsel %vm68, %v57, 0
    %v73 = vsel %vm68, %v58, 0
    %v76 = vsel %vm68, %v59, 0
    %78 = vmatprep.subr.mxu0 0.0
    %79 = vmatpush1.msra.mxu0 %v60
    %80 = vmatprep.subr.mxu0 0.0
    %81 = vmatpush1.msra.mxu0 %v61
    %82 = vmatprep.subr.mxu0 0.0
    %83 = vmatpush1.msra.mxu0 0.0
    %84 = vmatprep.subr.mxu0 0.0
    %85 = vmatpush1.msra.mxu0 0.0
    %86 = vmatprep.subr.mxu0 0.0
    %87 = vmatpush1.msra.mxu0 0.0
    %88 = vmatprep.subr.mxu0 0.0
    %89 = vmatpush1.msra.mxu0 0.0
    %90 = vmatprep.subr.mxu0 0.0
    %91 = vmatpush1.msra.mxu0 0.0
    %92 = vmatprep.subr.mxu0 0.0
    %93 = vmatpush1.msra.mxu0 0.0
    %94 = vmatprep.subr.mxu0 0.0
    %95 = vmatpush1.msra.mxu0 0.0
    %96 = vmatprep.subr.mxu0 0.0
    %97 = vmatpush1.msra.mxu0 0.0
    %98 = vmatprep.subr.mxu0 0.0
    %99 = vmatpush1.msra.mxu0 0.0
    %100 = vmatprep.subr.mxu0 0.0
    %101 = vmatpush1.msra.mxu0 0.0
    %102 = vmatprep.subr.mxu0 0.0
    %103 = vmatpush1.msra.mxu0 0.0
    %104 = vmatprep.subr.mxu0 0.0
    %105 = vmatpush1.msra.mxu0 0.0
    %106 = vmatprep.subr.mxu0 0.0
    %107 = vmatpush1.msra.mxu0 0.0
    %108 = vmatprep.subr.mxu0 0.0
    %109 = vmatpush1.msra.mxu0 0.0
    %110 = vmatprep.subr.mxu0 0.0
    %111 = vmatpush1.msra.mxu0 0.0
    %112 = vmatprep.subr.mxu0 0.0
    %113 = vmatpush1.msra.mxu0 0.0
    %114 = vmatprep.subr.mxu0 0.0
    %115 = vmatpush1.msra.mxu0 0.0
    %116 = vmatprep.subr.mxu0 0.0
    %117 = vmatpush1.msra.mxu0 0.0
    %118 = vmatprep.subr.mxu0 0.0
    %119 = vmatpush1.msra.mxu0 0.0
    %120 = vmatprep.subr.mxu0 0.0
    %121 = vmatpush1.msra.mxu0 0.0
    %122 = vmatprep.subr.mxu0 0.0
    %123 = vmatpush1.msra.mxu0 0.0
    %124 = vmatprep.subr.mxu0 0.0
    %125 = vmatpush1.msra.mxu0 0.0
    %126 = vmatprep.subr.mxu0 0.0
    %127 = vmatpush1.msra.mxu0 0.0
    %128 = vmatprep.subr.mxu0 0.0
    %129 = vmatpush1.msra.mxu0 0.0
    %130 = vmatprep.subr.mxu0 0.0
    %131 = vmatpush1.msra.mxu0 0.0
    %132 = vmatprep.subr.mxu0 0.0
    %133 = vmatpush1.msra.mxu0 0.0
    %134 = vmatprep.subr.mxu0 0.0
    %135 = vmatpush1.msra.mxu0 0.0
    %136 = vmatprep.subr.mxu0 0.0
    %137 = vmatpush1.msra.mxu0 0.0
    %138 = vmatprep.subr.mxu0 0.0
    %139 = vmatpush1.msra.mxu0 0.0
    %140 = vmatprep.subr.mxu0 0.0
    %141 = vmatpush1.msra.mxu0 0.0
    %142 = vmatprep.mubr.f32.mxu0 0.0
    %143 = vmatmul.mubr.f32.gmra.mrb[0].mxu0 %v70
    %v144 = vpop.f32.mrb[0].mxu0
    %v145 = vadd.f32 %v66, %v144
    %v146 = vpop.f32.mrb[0].mxu0
    %147 = vmatprep.mubr.f32.mxu0 0.0
    %148 = vmatmul.mubr.f32.gmra.mrb[0].mxu0 %v73
    %v149 = vpop.f32.mrb[0].mxu0
    %v150 = vadd.f32 %v66, %v149
    %v151 = vpop.f32.mrb[0].mxu0
    %152 = vmatprep.mubr.f32.mxu0 0.0
    %153 = vmatmul.mubr.f32.gmra.mrb[0].mxu0 %v76
    %v154 = vpop.f32.mrb[0].mxu0
    %v155 = vadd.f32 %v66, %v154
    %v156 = vpop.f32.mrb[0].mxu0
    %157 = vdwg.mxu0
    %vm158 = vcmask 261120
    %v160 = vsel %vm158, 0.0, 0
    %162 = vmatprep.subr.mxu0 0.0
    %163 = vmatpush1.msra.mxu0 %v52
    %164 = vmatprep.subr.mxu0 0.0
    %165 = vmatpush1.msra.mxu0 %v53
    %166 = vmatprep.subr.mxu0 0.0
    %167 = vmatpush1.msra.mxu0 %v54
    %168 = vmatprep.subr.mxu0 0.0
    %169 = vmatpush1.msra.mxu0 %v55
    %170 = vmatprep.subr.mxu0 0.0
    %171 = vmatpush1.msra.mxu0 0.0
    %172 = vmatprep.subr.mxu0 0.0
    %173 = vmatpush1.msra.mxu0 0.0
    %174 = vmatprep.subr.mxu0 0.0
    %175 = vmatpush1.msra.mxu0 0.0
    %176 = vmatprep.subr.mxu0 0.0
    %177 = vmatpush1.msra.mxu0 0.0
    %178 = vmatprep.subr.mxu0 0.0
    %179 = vmatpush1.msra.mxu0 0.0
    %180 = vmatprep.subr.mxu0 0.0
    %181 = vmatpush1.msra.mxu0 0.0
    %182 = vmatprep.subr.mxu0 0.0
    %183 = vmatpush1.msra.mxu0 0.0
    %184 = vmatprep.subr.mxu0 0.0
    %185 = vmatpush1.msra.mxu0 0.0
    %186 = vmatprep.subr.mxu0 0.0
    %187 = vmatpush1.msra.mxu0 0.0
    %188 = vmatprep.subr.mxu0 0.0
    %189 = vmatpush1.msra.mxu0 0.0
    %190 = vmatprep.subr.mxu0 0.0
    %191 = vmatpush1.msra.mxu0 0.0
    %192 = vmatprep.subr.mxu0 0.0
    %193 = vmatpush1.msra.mxu0 0.0
    %194 = vmatprep.subr.mxu0 0.0
    %195 = vmatpush1.msra.mxu0 0.0
    %196 = vmatprep.subr.mxu0 0.0
    %197 = vmatpush1.msra.mxu0 0.0
    %198 = vmatprep.subr.mxu0 0.0
    %199 = vmatpush1.msra.mxu0 0.0
    %200 = vmatprep.subr.mxu0 0.0
    %201 = vmatpush1.msra.mxu0 0.0
    %202 = vmatprep.subr.mxu0 0.0
    %203 = vmatpush1.msra.mxu0 0.0
    %204 = vmatprep.subr.mxu0 0.0
    %205 = vmatpush1.msra.mxu0 0.0
    %206 = vmatprep.subr.mxu0 0.0
    %207 = vmatpush1.msra.mxu0 0.0
    %208 = vmatprep.subr.mxu0 0.0
    %209 = vmatpush1.msra.mxu0 0.0
    %210 = vmatprep.subr.mxu0 0.0
    %211 = vmatpush1.msra.mxu0 0.0
    %212 = vmatprep.subr.mxu0 0.0
    %213 = vmatpush1.msra.mxu0 0.0
    %214 = vmatprep.subr.mxu0 0.0
    %215 = vmatpush1.msra.mxu0 0.0
    %216 = vmatprep.subr.mxu0 0.0
    %217 = vmatpush1.msra.mxu0 0.0
    %218 = vmatprep.subr.mxu0 0.0
    %219 = vmatpush1.msra.mxu0 0.0
    %220 = vmatprep.subr.mxu0 0.0
    %221 = vmatpush1.msra.mxu0 0.0
    %222 = vmatprep.subr.mxu0 0.0
    %223 = vmatpush1.msra.mxu0 0.0
    %224 = vmatprep.subr.mxu0 0.0
    %225 = vmatpush1.msra.mxu0 0.0
    %226 = vmatprep.mubr.f32.mxu0 0.0
    %227 = vmatmul.mubr.f32.gmra.mrb[0].mxu0 %v160
    %v228 = vpop.f32.mrb[0].mxu0
    %v229 = vadd.f32 0.0, %v228
    %v230 = vpop.f32.mrb[0].mxu0
    %231 = vdwg.mxu0
    %v232 = vadd.f32 %v145, %v229
    %v233 = vxor.u32 %v232, 2147483648
    %v234 = vmul.f32 %v233, 1.442695
    %v235 = vpow.pop %v234
    %v236 = vadd.f32 %v235, 1.0
    %v237 = vrcp.pop %v236
    %v238 = vmul.f32 1.0, %v237
    %v239 = vtanh.pop %v232
    %v240 = vmul.f32 %v238, 0.0
    %242 = vrot.lane.b32.xlu0 %v239, 64
    %v243 = vpop.permute.xlu0 %242
    %v245 = vmul.f32 %v238, %v243
    %247 = vrot.lane.b32.xlu0 %v245, 32
    %v248 = vpop.permute.xlu0 %247
    %v250 = vadd.f32 %v240, %v248
    %v251 = vtanh.pop %v250
    %253 = vrot.lane.b32.xlu0 %v251, 64
    %v254 = vpop.permute.xlu0 %253
    %v256 = vmul.f32 %v238, %v254
    %258 = vrot.lane.b32.xlu0 %v256, 32
    %v259 = vpop.permute.xlu0 %258
    %vm261 = vcmask 254976
    %262 = vst.msk [vmem:[#allocation2] sm:$0x3] %vm261, %v259
    %v263 = vsel %vm158, %v259, 0
    %265 = vmatprep.subr.mxu0 0.0
    %266 = vmatpush1.msra.mxu0 %v52
    %267 = vmatprep.subr.mxu0 0.0
    %268 = vmatpush1.msra.mxu0 %v53
    %269 = vmatprep.subr.mxu0 0.0
    %270 = vmatpush1.msra.mxu0 %v54
    %271 = vmatprep.subr.mxu0 0.0
    %272 = vmatpush1.msra.mxu0 %v55
    %273 = vmatprep.subr.mxu0 0.0
    %274 = vmatpush1.msra.mxu0 0.0
    %275 = vmatprep.subr.mxu0 0.0
    %276 = vmatpush1.msra.mxu0 0.0
    %277 = vmatprep.subr.mxu0 0.0
    %278 = vmatpush1.msra.mxu0 0.0
    %279 = vmatprep.subr.mxu0 0.0
    %280 = vmatpush1.msra.mxu0 0.0
    %281 = vmatprep.subr.mxu0 0.0
    %282 = vmatpush1.msra.mxu0 0.0
    %283 = vmatprep.subr.mxu0 0.0
    %284 = vmatpush1.msra.mxu0 0.0
    %285 = vmatprep.subr.mxu0 0.0
    %286 = vmatpush1.msra.mxu0 0.0
    %287 = vmatprep.subr.mxu0 0.0
    %288 = vmatpush1.msra.mxu0 0.0
    %289 = vmatprep.subr.mxu0 0.0
    %290 = vmatpush1.msra.mxu0 0.0
    %291 = vmatprep.subr.mxu0 0.0
    %292 = vmatpush1.msra.mxu0 0.0
    %293 = vmatprep.subr.mxu0 0.0
    %294 = vmatpush1.msra.mxu0 0.0
    %295 = vmatprep.subr.mxu0 0.0
    %296 = vmatpush1.msra.mxu0 0.0
    %297 = vmatprep.subr.mxu0 0.0
    %298 = vmatpush1.msra.mxu0 0.0
    %299 = vmatprep.subr.mxu0 0.0
    %300 = vmatpush1.msra.mxu0 0.0
    %301 = vmatprep.subr.mxu0 0.0
    %302 = vmatpush1.msra.mxu0 0.0
    %303 = vmatprep.subr.mxu0 0.0
    %304 = vmatpush1.msra.mxu0 0.0
    %305 = vmatprep.subr.mxu0 0.0
    %306 = vmatpush1.msra.mxu0 0.0
    %307 = vmatprep.subr.mxu0 0.0
    %308 = vmatpush1.msra.mxu0 0.0
    %309 = vmatprep.subr.mxu0 0.0
    %310 = vmatpush1.msra.mxu0 0.0
    %311 = vmatprep.subr.mxu0 0.0
    %312 = vmatpush1.msra.mxu0 0.0
    %313 = vmatprep.subr.mxu0 0.0
    %314 = vmatpush1.msra.mxu0 0.0
    %315 = vmatprep.subr.mxu0 0.0
    %316 = vmatpush1.msra.mxu0 0.0
    %317 = vmatprep.subr.mxu0 0.0
    %318 = vmatpush1.msra.mxu0 0.0
    %319 = vmatprep.subr.mxu0 0.0
    %320 = vmatpush1.msra.mxu0 0.0
    %321 = vmatprep.subr.mxu0 0.0
    %322 = vmatpush1.msra.mxu0 0.0
    %323 = vmatprep.subr.mxu0 0.0
    %324 = vmatpush1.msra.mxu0 0.0
    %325 = vmatprep.subr.mxu0 0.0
    %326 = vmatpush1.msra.mxu0 0.0
    %327 = vmatprep.subr.mxu0 0.0
    %328 = vmatpush1.msra.mxu0 0.0
    %329 = vmatprep.mubr.f32.mxu0 0.0
    %330 = vmatmul.mubr.f32.gmra.mrb[0].mxu0 %v263
    %v331 = vpop.f32.mrb[0].mxu0
    %v332 = vadd.f32 0.0, %v331
    %v333 = vpop.f32.mrb[0].mxu0
    %334 = vdwg.mxu0
    %v336 = vrot.slane %v332, 6
    %v338 = vadd.f32 %v145, %v336
    %v339 = vxor.u32 %v338, 2147483648
    %v340 = vmul.f32 %v339, 1.442695
    %v341 = vpow.pop %v340
    %v342 = vadd.f32 %v341, 1.0
    %v343 = vrcp.pop %v342
    %v344 = vmul.f32 1.0, %v343
    %v345 = vtanh.pop %v338
    %v347 = vrot.slane %v250, 6
    %v349 = vmul.f32 %v344, %v347
    %351 = vrot.lane.b32.xlu0 %v345, 64
    %v352 = vpop.permute.xlu0 %351
    %v354 = vmul.f32 %v344, %v352
    %356 = vrot.lane.b32.xlu0 %v354, 32
    %v357 = vpop.permute.xlu0 %356
    %v359 = vadd.f32 %v349, %v357
    %v360 = vtanh.pop %v359
    %362 = vrot.lane.b32.xlu0 %v360, 64
    %v363 = vpop.permute.xlu0 %362
    %v365 = vmul.f32 %v344, %v363
    %367 = vrot.lane.b32.xlu0 %v365, 32
    %v368 = vpop.permute.xlu0 %367
    %vm370 = vcmask 257026
    %371 = vst.msk [vmem:[#allocation2] sm:$0xc] %vm370, %v368
    %v372 = vrot.slane %v365, 2
    %373 = vrot.lane.b32.xlu0 %v372, 32
    %v374 = vpop.permute.xlu0 %373
    %v375 = vsel %vm158, %v374, 0
    %377 = vmatprep.subr.mxu0 0.0
    %378 = vmatpush1.msra.mxu0 %v52
    %379 = vmatprep.subr.mxu0 0.0
    %380 = vmatpush1.msra.mxu0 %v53
    %381 = vmatprep.subr.mxu0 0.0
    %382 = vmatpush1.msra.mxu0 %v54
    %383 = vmatprep.subr.mxu0 0.0
    %384 = vmatpush1.msra.mxu0 %v55
    %385 = vmatprep.subr.mxu0 0.0
    %386 = vmatpush1.msra.mxu0 0.0
    %387 = vmatprep.subr.mxu0 0.0
    %388 = vmatpush1.msra.mxu0 0.0
    %389 = vmatprep.subr.mxu0 0.0
    %390 = vmatpush1.msra.mxu0 0.0
    %391 = vmatprep.subr.mxu0 0.0
    %392 = vmatpush1.msra.mxu0 0.0
    %393 = vmatprep.subr.mxu0 0.0
    %394 = vmatpush1.msra.mxu0 0.0
    %395 = vmatprep.subr.mxu0 0.0
    %396 = vmatpush1.msra.mxu0 0.0
    %397 = vmatprep.subr.mxu0 0.0
    %398 = vmatpush1.msra.mxu0 0.0
    %399 = vmatprep.subr.mxu0 0.0
    %400 = vmatpush1.msra.mxu0 0.0
    %401 = vmatprep.subr.mxu0 0.0
    %402 = vmatpush1.msra.mxu0 0.0
    %403 = vmatprep.subr.mxu0 0.0
    %404 = vmatpush1.msra.mxu0 0.0
    %405 = vmatprep.subr.mxu0 0.0
    %406 = vmatpush1.msra.mxu0 0.0
    %407 = vmatprep.subr.mxu0 0.0
    %408 = vmatpush1.msra.mxu0 0.0
    %409 = vmatprep.subr.mxu0 0.0
    %410 = vmatpush1.msra.mxu0 0.0
    %411 = vmatprep.subr.mxu0 0.0
    %412 = vmatpush1.msra.mxu0 0.0
    %413 = vmatprep.subr.mxu0 0.0
    %414 = vmatpush1.msra.mxu0 0.0
    %415 = vmatprep.subr.mxu0 0.0
    %416 = vmatpush1.msra.mxu0 0.0
    %417 = vmatprep.subr.mxu0 0.0
    %418 = vmatpush1.msra.mxu0 0.0
    %419 = vmatprep.subr.mxu0 0.0
    %420 = vmatpush1.msra.mxu0 0.0
    %421 = vmatprep.subr.mxu0 0.0
    %422 = vmatpush1.msra.mxu0 0.0
    %423 = vmatprep.subr.mxu0 0.0
    %424 = vmatpush1.msra.mxu0 0.0
    %425 = vmatprep.subr.mxu0 0.0
    %426 = vmatpush1.msra.mxu0 0.0
    %427 = vmatprep.subr.mxu0 0.0
    %428 = vmatpush1.msra.mxu0 0.0
    %429 = vmatprep.subr.mxu0 0.0
    %430 = vmatpush1.msra.mxu0 0.0
    %431 = vmatprep.subr.mxu0 0.0
    %432 = vmatpush1.msra.mxu0 0.0
    %433 = vmatprep.subr.mxu0 0.0
    %434 = vmatpush1.msra.mxu0 0.0
    %435 = vmatprep.subr.mxu0 0.0
    %436 = vmatpush1.msra.mxu0 0.0
    %437 = vmatprep.subr.mxu0 0.0
    %438 = vmatpush1.msra.mxu0 0.0
    %439 = vmatprep.subr.mxu0 0.0
    %440 = vmatpush1.msra.mxu0 0.0
    %441 = vmatprep.mubr.f32.mxu0 0.0
    %442 = vmatmul.mubr.f32.gmra.mrb[0].mxu0 %v375
    %v443 = vpop.f32.mrb[0].mxu0
    %v444 = vadd.f32 0.0, %v443
    %v445 = vpop.f32.mrb[0].mxu0
    %446 = vdwg.mxu0
    %v448 = vrot.slane %v444, 4
    %v450 = vadd.f32 %v145, %v448
    %v451 = vxor.u32 %v450, 2147483648
    %v452 = vmul.f32 %v451, 1.442695
    %v453 = vpow.pop %v452
    %v454 = vadd.f32 %v453, 1.0
    %v455 = vrcp.pop %v454
    %v456 = vmul.f32 1.0, %v455
    %v457 = vtanh.pop %v450
    %v459 = vrot.slane %v359, 6
    %v461 = vmul.f32 %v456, %v459
    %463 = vrot.lane.b32.xlu0 %v457, 64
    %v464 = vpop.permute.xlu0 %463
    %v466 = vmul.f32 %v456, %v464
    %468 = vrot.lane.b32.xlu0 %v466, 32
    %v469 = vpop.permute.xlu0 %468
    %v471 = vadd.f32 %v461, %v469
    %v472 = vtanh.pop %v471
    %474 = vrot.lane.b32.xlu0 %v472, 64
    %v475 = vpop.permute.xlu0 %474
    %v477 = vmul.f32 %v456, %v475
    %479 = vrot.lane.b32.xlu0 %v477, 32
    %v480 = vpop.permute.xlu0 %479
    %vm482 = vcmask 259076
    %483 = vst.msk [vmem:[#allocation2] sm:$0x30] %vm482, %v480
    %v484 = vrot.slane %v477, 4
    %485 = vrot.lane.b32.xlu0 %v484, 32
    %v486 = vpop.permute.xlu0 %485
    %v487 = vsel %vm158, %v486, 0
    %489 = vmatprep.subr.mxu0 0.0
    %490 = vmatpush1.msra.mxu0 %v52
    %491 = vmatprep.subr.mxu0 0.0
    %492 = vmatpush1.msra.mxu0 %v53
    %493 = vmatprep.subr.mxu0 0.0
    %494 = vmatpush1.msra.mxu0 %v54
    %495 = vmatprep.subr.mxu0 0.0
    %496 = vmatpush1.msra.mxu0 %v55
    %497 = vmatprep.subr.mxu0 0.0
    %498 = vmatpush1.msra.mxu0 0.0
    %499 = vmatprep.subr.mxu0 0.0
    %500 = vmatpush1.msra.mxu0 0.0
    %501 = vmatprep.subr.mxu0 0.0
    %502 = vmatpush1.msra.mxu0 0.0
    %503 = vmatprep.subr.mxu0 0.0
    %504 = vmatpush1.msra.mxu0 0.0
    %505 = vmatprep.subr.mxu0 0.0
    %506 = vmatpush1.msra.mxu0 0.0
    %507 = vmatprep.subr.mxu0 0.0
    %508 = vmatpush1.msra.mxu0 0.0
    %509 = vmatprep.subr.mxu0 0.0
    %510 = vmatpush1.msra.mxu0 0.0
    %511 = vmatprep.subr.mxu0 0.0
    %512 = vmatpush1.msra.mxu0 0.0
    %513 = vmatprep.subr.mxu0 0.0
    %514 = vmatpush1.msra.mxu0 0.0
    %515 = vmatprep.subr.mxu0 0.0
    %516 = vmatpush1.msra.mxu0 0.0
    %517 = vmatprep.subr.mxu0 0.0
    %518 = vmatpush1.msra.mxu0 0.0
    %519 = vmatprep.subr.mxu0 0.0
    %520 = vmatpush1.msra.mxu0 0.0
    %521 = vmatprep.subr.mxu0 0.0
    %522 = vmatpush1.msra.mxu0 0.0
    %523 = vmatprep.subr.mxu0 0.0
    %524 = vmatpush1.msra.mxu0 0.0
    %525 = vmatprep.subr.mxu0 0.0
    %526 = vmatpush1.msra.mxu0 0.0
    %527 = vmatprep.subr.mxu0 0.0
    %528 = vmatpush1.msra.mxu0 0.0
    %529 = vmatprep.subr.mxu0 0.0
    %530 = vmatpush1.msra.mxu0 0.0
    %531 = vmatprep.subr.mxu0 0.0
    %532 = vmatpush1.msra.mxu0 0.0
    %533 = vmatprep.subr.mxu0 0.0
    %534 = vmatpush1.msra.mxu0 0.0
    %535 = vmatprep.subr.mxu0 0.0
    %536 = vmatpush1.msra.mxu0 0.0
    %537 = vmatprep.subr.mxu0 0.0
    %538 = vmatpush1.msra.mxu0 0.0
    %539 = vmatprep.subr.mxu0 0.0
    %540 = vmatpush1.msra.mxu0 0.0
    %541 = vmatprep.subr.mxu0 0.0
    %542 = vmatpush1.msra.mxu0 0.0
    %543 = vmatprep.subr.mxu0 0.0
    %544 = vmatpush1.msra.mxu0 0.0
    %545 = vmatprep.subr.mxu0 0.0
    %546 = vmatpush1.msra.mxu0 0.0
    %547 = vmatprep.subr.mxu0 0.0
    %548 = vmatpush1.msra.mxu0 0.0
    %549 = vmatprep.subr.mxu0 0.0
    %550 = vmatpush1.msra.mxu0 0.0
    %551 = vmatprep.subr.mxu0 0.0
    %552 = vmatpush1.msra.mxu0 0.0
    %553 = vmatprep.mubr.f32.mxu0 0.0
    %554 = vmatmul.mubr.f32.gmra.mrb[0].mxu0 %v487
    %v555 = vpop.f32.mrb[0].mxu0
    %v556 = vadd.f32 0.0, %v555
    %v557 = vpop.f32.mrb[0].mxu0
    %558 = vdwg.mxu0
    %v560 = vrot.slane %v556, 2
    %v562 = vadd.f32 %v145, %v560
    %v563 = vxor.u32 %v562, 2147483648
    %v564 = vmul.f32 %v563, 1.442695
    %v565 = vpow.pop %v564
    %v566 = vadd.f32 %v565, 1.0
    %v567 = vrcp.pop %v566
    %v568 = vmul.f32 1.0, %v567
    %v569 = vtanh.pop %v562
    %v571 = vrot.slane %v471, 6
    %v573 = vmul.f32 %v568, %v571
    %575 = vrot.lane.b32.xlu0 %v569, 64
    %v576 = vpop.permute.xlu0 %575
    %v578 = vmul.f32 %v568, %v576
    %580 = vrot.lane.b32.xlu0 %v578, 32
    %v581 = vpop.permute.xlu0 %580
    %v583 = vadd.f32 %v573, %v581
    %v584 = vtanh.pop %v583
    %586 = vrot.lane.b32.xlu0 %v584, 64
    %v587 = vpop.permute.xlu0 %586
    %v589 = vmul.f32 %v568, %v587
    %591 = vrot.lane.b32.xlu0 %v589, 32
    %v592 = vpop.permute.xlu0 %591
    %vm594 = vcmask 261126
    %595 = vst.msk [vmem:[#allocation2] sm:$0xc0] %vm594, %v592
    %v596 = vrot.slane %v589, 6
    %597 = vrot.lane.b32.xlu0 %v596, 32
    %v598 = vpop.permute.xlu0 %597
    %v599 = vsel %vm158, %v598, 0
    %601 = vmatprep.subr.mxu0 0.0
    %602 = vmatpush1.msra.mxu0 %v52
    %603 = vmatprep.subr.mxu0 0.0
    %604 = vmatpush1.msra.mxu0 %v53
    %605 = vmatprep.subr.mxu0 0.0
    %606 = vmatpush1.msra.mxu0 %v54
    %607 = vmatprep.subr.mxu0 0.0
    %608 = vmatpush1.msra.mxu0 %v55
    %609 = vmatprep.subr.mxu0 0.0
    %610 = vmatpush1.msra.mxu0 0.0
    %611 = vmatprep.subr.mxu0 0.0
    %612 = vmatpush1.msra.mxu0 0.0
    %613 = vmatprep.subr.mxu0 0.0
    %614 = vmatpush1.msra.mxu0 0.0
    %615 = vmatprep.subr.mxu0 0.0
    %616 = vmatpush1.msra.mxu0 0.0
    %617 = vmatprep.subr.mxu0 0.0
    %618 = vmatpush1.msra.mxu0 0.0
    %619 = vmatprep.subr.mxu0 0.0
    %620 = vmatpush1.msra.mxu0 0.0
    %621 = vmatprep.subr.mxu0 0.0
    %622 = vmatpush1.msra.mxu0 0.0
    %623 = vmatprep.subr.mxu0 0.0
    %624 = vmatpush1.msra.mxu0 0.0
    %625 = vmatprep.subr.mxu0 0.0
    %626 = vmatpush1.msra.mxu0 0.0
    %627 = vmatprep.subr.mxu0 0.0
    %628 = vmatpush1.msra.mxu0 0.0
    %629 = vmatprep.subr.mxu0 0.0
    %630 = vmatpush1.msra.mxu0 0.0
    %631 = vmatprep.subr.mxu0 0.0
    %632 = vmatpush1.msra.mxu0 0.0
    %633 = vmatprep.subr.mxu0 0.0
    %634 = vmatpush1.msra.mxu0 0.0
    %635 = vmatprep.subr.mxu0 0.0
    %636 = vmatpush1.msra.mxu0 0.0
    %637 = vmatprep.subr.mxu0 0.0
    %638 = vmatpush1.msra.mxu0 0.0
    %639 = vmatprep.subr.mxu0 0.0
    %640 = vmatpush1.msra.mxu0 0.0
    %641 = vmatprep.subr.mxu0 0.0
    %642 = vmatpush1.msra.mxu0 0.0
    %643 = vmatprep.subr.mxu0 0.0
    %644 = vmatpush1.msra.mxu0 0.0
    %645 = vmatprep.subr.mxu0 0.0
    %646 = vmatpush1.msra.mxu0 0.0
    %647 = vmatprep.subr.mxu0 0.0
    %648 = vmatpush1.msra.mxu0 0.0
    %649 = vmatprep.subr.mxu0 0.0
    %650 = vmatpush1.msra.mxu0 0.0
    %651 = vmatprep.subr.mxu0 0.0
    %652 = vmatpush1.msra.mxu0 0.0
    %653 = vmatprep.subr.mxu0 0.0
    %654 = vmatpush1.msra.mxu0 0.0
    %655 = vmatprep.subr.mxu0 0.0
    %656 = vmatpush1.msra.mxu0 0.0
    %657 = vmatprep.subr.mxu0 0.0
    %658 = vmatpush1.msra.mxu0 0.0
    %659 = vmatprep.subr.mxu0 0.0
    %660 = vmatpush1.msra.mxu0 0.0
    %661 = vmatprep.subr.mxu0 0.0
    %662 = vmatpush1.msra.mxu0 0.0
    %663 = vmatprep.subr.mxu0 0.0
    %664 = vmatpush1.msra.mxu0 0.0
    %665 = vmatprep.mubr.f32.mxu0 0.0
    %666 = vmatmul.mubr.f32.gmra.mrb[0].mxu0 %v599
    %v667 = vpop.f32.mrb[0].mxu0
    %v668 = vadd.f32 0.0, %v667
    %v669 = vpop.f32.mrb[0].mxu0
    %670 = vdwg.mxu0
    %v671 = vadd.f32 %v150, %v668
    %v672 = vxor.u32 %v671, 2147483648
    %v673 = vmul.f32 %v672, 1.442695
    %v674 = vpow.pop %v673
    %v675 = vadd.f32 %v674, 1.0
    %v676 = vrcp.pop %v675
    %v677 = vmul.f32 1.0, %v676
    %v678 = vtanh.pop %v671
    %v680 = vrot.slane %v583, 6
    %v682 = vmul.f32 %v677, %v680
    %684 = vrot.lane.b32.xlu0 %v678, 64
    %v685 = vpop.permute.xlu0 %684
    %v687 = vmul.f32 %v677, %v685
    %689 = vrot.lane.b32.xlu0 %v687, 32
    %v690 = vpop.permute.xlu0 %689
    %v692 = vadd.f32 %v682, %v690
    %v693 = vtanh.pop %v692
    %695 = vrot.lane.b32.xlu0 %v693, 64
    %v696 = vpop.permute.xlu0 %695
    %v698 = vmul.f32 %v677, %v696
    %700 = vrot.lane.b32.xlu0 %v698, 32
    %v701 = vpop.permute.xlu0 %700
    %703 = vst.msk [vmem:[#allocation2 + $0x8] sm:$0x3] %vm261, %v701
    %v704 = vsel %vm158, %v701, 0
    %706 = vmatprep.subr.mxu0 0.0
    %707 = vmatpush1.msra.mxu0 %v52
    %708 = vmatprep.subr.mxu0 0.0
    %709 = vmatpush1.msra.mxu0 %v53
    %710 = vmatprep.subr.mxu0 0.0
    %711 = vmatpush1.msra.mxu0 %v54
    %712 = vmatprep.subr.mxu0 0.0
    %713 = vmatpush1.msra.mxu0 %v55
    %714 = vmatprep.subr.mxu0 0.0
    %715 = vmatpush1.msra.mxu0 0.0
    %716 = vmatprep.subr.mxu0 0.0
    %717 = vmatpush1.msra.mxu0 0.0
    %718 = vmatprep.subr.mxu0 0.0
    %719 = vmatpush1.msra.mxu0 0.0
    %720 = vmatprep.subr.mxu0 0.0
    %721 = vmatpush1.msra.mxu0 0.0
    %722 = vmatprep.subr.mxu0 0.0
    %723 = vmatpush1.msra.mxu0 0.0
    %724 = vmatprep.subr.mxu0 0.0
    %725 = vmatpush1.msra.mxu0 0.0
    %726 = vmatprep.subr.mxu0 0.0
    %727 = vmatpush1.msra.mxu0 0.0
    %728 = vmatprep.subr.mxu0 0.0
    %729 = vmatpush1.msra.mxu0 0.0
    %730 = vmatprep.subr.mxu0 0.0
    %731 = vmatpush1.msra.mxu0 0.0
    %732 = vmatprep.subr.mxu0 0.0
    %733 = vmatpush1.msra.mxu0 0.0
    %734 = vmatprep.subr.mxu0 0.0
    %735 = vmatpush1.msra.mxu0 0.0
    %736 = vmatprep.subr.mxu0 0.0
    %737 = vmatpush1.msra.mxu0 0.0
    %738 = vmatprep.subr.mxu0 0.0
    %739 = vmatpush1.msra.mxu0 0.0
    %740 = vmatprep.subr.mxu0 0.0
    %741 = vmatpush1.msra.mxu0 0.0
    %742 = vmatprep.subr.mxu0 0.0
    %743 = vmatpush1.msra.mxu0 0.0
    %744 = vmatprep.subr.mxu0 0.0
    %745 = vmatpush1.msra.mxu0 0.0
    %746 = vmatprep.subr.mxu0 0.0
    %747 = vmatpush1.msra.mxu0 0.0
    %748 = vmatprep.subr.mxu0 0.0
    %749 = vmatpush1.msra.mxu0 0.0
    %750 = vmatprep.subr.mxu0 0.0
    %751 = vmatpush1.msra.mxu0 0.0
    %752 = vmatprep.subr.mxu0 0.0
    %753 = vmatpush1.msra.mxu0 0.0
    %754 = vmatprep.subr.mxu0 0.0
    %755 = vmatpush1.msra.mxu0 0.0
    %756 = vmatprep.subr.mxu0 0.0
    %757 = vmatpush1.msra.mxu0 0.0
    %758 = vmatprep.subr.mxu0 0.0
    %759 = vmatpush1.msra.mxu0 0.0
    %760 = vmatprep.subr.mxu0 0.0
    %761 = vmatpush1.msra.mxu0 0.0
    %762 = vmatprep.subr.mxu0 0.0
    %763 = vmatpush1.msra.mxu0 0.0
    %764 = vmatprep.subr.mxu0 0.0
    %765 = vmatpush1.msra.mxu0 0.0
    %766 = vmatprep.subr.mxu0 0.0
    %767 = vmatpush1.msra.mxu0 0.0
    %768 = vmatprep.subr.mxu0 0.0
    %769 = vmatpush1.msra.mxu0 0.0
    %770 = vmatprep.mubr.f32.mxu0 0.0
    %771 = vmatmul.mubr.f32.gmra.mrb[0].mxu0 %v704
    %v772 = vpop.f32.mrb[0].mxu0
    %v773 = vadd.f32 0.0, %v772
    %v774 = vpop.f32.mrb[0].mxu0
    %775 = vdwg.mxu0
    %v777 = vrot.slane %v773, 6
    %v779 = vadd.f32 %v150, %v777
    %v780 = vxor.u32 %v779, 2147483648
    %v781 = vmul.f32 %v780, 1.442695
    %v782 = vpow.pop %v781
    %v783 = vadd.f32 %v782, 1.0
    %v784 = vrcp.pop %v783
    %v785 = vmul.f32 1.0, %v784
    %v786 = vtanh.pop %v779
    %v788 = vrot.slane %v692, 6
    %v790 = vmul.f32 %v785, %v788
    %792 = vrot.lane.b32.xlu0 %v786, 64
    %v793 = vpop.permute.xlu0 %792
    %v795 = vmul.f32 %v785, %v793
    %797 = vrot.lane.b32.xlu0 %v795, 32
    %v798 = vpop.permute.xlu0 %797
    %v800 = vadd.f32 %v790, %v798
    %v801 = vtanh.pop %v800
    %803 = vrot.lane.b32.xlu0 %v801, 64
    %v804 = vpop.permute.xlu0 %803
    %v806 = vmul.f32 %v785, %v804
    %808 = vrot.lane.b32.xlu0 %v806, 32
    %v809 = vpop.permute.xlu0 %808
    %811 = vst.msk [vmem:[#allocation2 + $0x8] sm:$0xc] %vm370, %v809
    %v812 = vrot.slane %v806, 2
    %813 = vrot.lane.b32.xlu0 %v812, 32
    %v814 = vpop.permute.xlu0 %813
    %v815 = vsel %vm158, %v814, 0
    %817 = vmatprep.subr.mxu0 0.0
    %818 = vmatpush1.msra.mxu0 %v52
    %819 = vmatprep.subr.mxu0 0.0
    %820 = vmatpush1.msra.mxu0 %v53
    %821 = vmatprep.subr.mxu0 0.0
    %822 = vmatpush1.msra.mxu0 %v54
    %823 = vmatprep.subr.mxu0 0.0
    %824 = vmatpush1.msra.mxu0 %v55
    %825 = vmatprep.subr.mxu0 0.0
    %826 = vmatpush1.msra.mxu0 0.0
    %827 = vmatprep.subr.mxu0 0.0
    %828 = vmatpush1.msra.mxu0 0.0
    %829 = vmatprep.subr.mxu0 0.0
    %830 = vmatpush1.msra.mxu0 0.0
    %831 = vmatprep.subr.mxu0 0.0
    %832 = vmatpush1.msra.mxu0 0.0
    %833 = vmatprep.subr.mxu0 0.0
    %834 = vmatpush1.msra.mxu0 0.0
    %835 = vmatprep.subr.mxu0 0.0
    %836 = vmatpush1.msra.mxu0 0.0
    %837 = vmatprep.subr.mxu0 0.0
    %838 = vmatpush1.msra.mxu0 0.0
    %839 = vmatprep.subr.mxu0 0.0
    %840 = vmatpush1.msra.mxu0 0.0
    %841 = vmatprep.subr.mxu0 0.0
    %842 = vmatpush1.msra.mxu0 0.0
    %843 = vmatprep.subr.mxu0 0.0
    %844 = vmatpush1.msra.mxu0 0.0
    %845 = vmatprep.subr.mxu0 0.0
    %846 = vmatpush1.msra.mxu0 0.0
    %847 = vmatprep.subr.mxu0 0.0
    %848 = vmatpush1.msra.mxu0 0.0
    %849 = vmatprep.subr.mxu0 0.0
    %850 = vmatpush1.msra.mxu0 0.0
    %851 = vmatprep.subr.mxu0 0.0
    %852 = vmatpush1.msra.mxu0 0.0
    %853 = vmatprep.subr.mxu0 0.0
    %854 = vmatpush1.msra.mxu0 0.0
    %855 = vmatprep.subr.mxu0 0.0
    %856 = vmatpush1.msra.mxu0 0.0
    %857 = vmatprep.subr.mxu0 0.0
    %858 = vmatpush1.msra.mxu0 0.0
    %859 = vmatprep.subr.mxu0 0.0
    %860 = vmatpush1.msra.mxu0 0.0
    %861 = vmatprep.subr.mxu0 0.0
    %862 = vmatpush1.msra.mxu0 0.0
    %863 = vmatprep.subr.mxu0 0.0
    %864 = vmatpush1.msra.mxu0 0.0
    %865 = vmatprep.subr.mxu0 0.0
    %866 = vmatpush1.msra.mxu0 0.0
    %867 = vmatprep.subr.mxu0 0.0
    %868 = vmatpush1.msra.mxu0 0.0
    %869 = vmatprep.subr.mxu0 0.0
    %870 = vmatpush1.msra.mxu0 0.0
    %871 = vmatprep.subr.mxu0 0.0
    %872 = vmatpush1.msra.mxu0 0.0
    %873 = vmatprep.subr.mxu0 0.0
    %874 = vmatpush1.msra.mxu0 0.0
    %875 = vmatprep.subr.mxu0 0.0
    %876 = vmatpush1.msra.mxu0 0.0
    %877 = vmatprep.subr.mxu0 0.0
    %878 = vmatpush1.msra.mxu0 0.0
    %879 = vmatprep.subr.mxu0 0.0
    %880 = vmatpush1.msra.mxu0 0.0
    %881 = vmatprep.mubr.f32.mxu0 0.0
    %882 = vmatmul.mubr.f32.gmra.mrb[0].mxu0 %v815
    %v883 = vpop.f32.mrb[0].mxu0
    %v884 = vadd.f32 0.0, %v883
    %v885 = vpop.f32.mrb[0].mxu0
    %886 = vdwg.mxu0
    %v888 = vrot.slane %v884, 4
    %v890 = vadd.f32 %v150, %v888
    %v891 = vxor.u32 %v890, 2147483648
    %v892 = vmul.f32 %v891, 1.442695
    %v893 = vpow.pop %v892
    %v894 = vadd.f32 %v893, 1.0
    %v895 = vrcp.pop %v894
    %v896 = vmul.f32 1.0, %v895
    %v897 = vtanh.pop %v890
    %v899 = vrot.slane %v800, 6
    %v901 = vmul.f32 %v896, %v899
    %903 = vrot.lane.b32.xlu0 %v897, 64
    %v904 = vpop.permute.xlu0 %903
    %v906 = vmul.f32 %v896, %v904
    %908 = vrot.lane.b32.xlu0 %v906, 32
    %v909 = vpop.permute.xlu0 %908
    %v911 = vadd.f32 %v901, %v909
    %v912 = vtanh.pop %v911
    %914 = vrot.lane.b32.xlu0 %v912, 64
    %v915 = vpop.permute.xlu0 %914
    %v917 = vmul.f32 %v896, %v915
    %919 = vrot.lane.b32.xlu0 %v917, 32
    %v920 = vpop.permute.xlu0 %919
    %922 = vst.msk [vmem:[#allocation2 + $0x8] sm:$0x30] %vm482, %v920
    %v923 = vrot.slane %v917, 4
    %924 = vrot.lane.b32.xlu0 %v923, 32
    %v925 = vpop.permute.xlu0 %924
    %v926 = vsel %vm158, %v925, 0
    %928 = vmatprep.subr.mxu0 0.0
    %929 = vmatpush1.msra.mxu0 %v52
    %930 = vmatprep.subr.mxu0 0.0
    %931 = vmatpush1.msra.mxu0 %v53
    %932 = vmatprep.subr.mxu0 0.0
    %933 = vmatpush1.msra.mxu0 %v54
    %934 = vmatprep.subr.mxu0 0.0
    %935 = vmatpush1.msra.mxu0 %v55
    %936 = vmatprep.subr.mxu0 0.0
    %937 = vmatpush1.msra.mxu0 0.0
    %938 = vmatprep.subr.mxu0 0.0
    %939 = vmatpush1.msra.mxu0 0.0
    %940 = vmatprep.subr.mxu0 0.0
    %941 = vmatpush1.msra.mxu0 0.0
    %942 = vmatprep.subr.mxu0 0.0
    %943 = vmatpush1.msra.mxu0 0.0
    %944 = vmatprep.subr.mxu0 0.0
    %945 = vmatpush1.msra.mxu0 0.0
    %946 = vmatprep.subr.mxu0 0.0
    %947 = vmatpush1.msra.mxu0 0.0
    %948 = vmatprep.subr.mxu0 0.0
    %949 = vmatpush1.msra.mxu0 0.0
    %950 = vmatprep.subr.mxu0 0.0
    %951 = vmatpush1.msra.mxu0 0.0
    %952 = vmatprep.subr.mxu0 0.0
    %953 = vmatpush1.msra.mxu0 0.0
    %954 = vmatprep.subr.mxu0 0.0
    %955 = vmatpush1.msra.mxu0 0.0
    %956 = vmatprep.subr.mxu0 0.0
    %957 = vmatpush1.msra.mxu0 0.0
    %958 = vmatprep.subr.mxu0 0.0
    %959 = vmatpush1.msra.mxu0 0.0
    %960 = vmatprep.subr.mxu0 0.0
    %961 = vmatpush1.msra.mxu0 0.0
    %962 = vmatprep.subr.mxu0 0.0
    %963 = vmatpush1.msra.mxu0 0.0
    %964 = vmatprep.subr.mxu0 0.0
    %965 = vmatpush1.msra.mxu0 0.0
    %966 = vmatprep.subr.mxu0 0.0
    %967 = vmatpush1.msra.mxu0 0.0
    %968 = vmatprep.subr.mxu0 0.0
    %969 = vmatpush1.msra.mxu0 0.0
    %970 = vmatprep.subr.mxu0 0.0
    %971 = vmatpush1.msra.mxu0 0.0
    %972 = vmatprep.subr.mxu0 0.0
    %973 = vmatpush1.msra.mxu0 0.0
    %974 = vmatprep.subr.mxu0 0.0
    %975 = vmatpush1.msra.mxu0 0.0
    %976 = vmatprep.subr.mxu0 0.0
    %977 = vmatpush1.msra.mxu0 0.0
    %978 = vmatprep.subr.mxu0 0.0
    %979 = vmatpush1.msra.mxu0 0.0
    %980 = vmatprep.subr.mxu0 0.0
    %981 = vmatpush1.msra.mxu0 0.0
    %982 = vmatprep.subr.mxu0 0.0
    %983 = vmatpush1.msra.mxu0 0.0
    %984 = vmatprep.subr.mxu0 0.0
    %985 = vmatpush1.msra.mxu0 0.0
    %986 = vmatprep.subr.mxu0 0.0
    %987 = vmatpush1.msra.mxu0 0.0
    %988 = vmatprep.subr.mxu0 0.0
    %989 = vmatpush1.msra.mxu0 0.0
    %990 = vmatprep.subr.mxu0 0.0
    %991 = vmatpush1.msra.mxu0 0.0
    %992 = vmatprep.mubr.f32.mxu0 0.0
    %993 = vmatmul.mubr.f32.gmra.mrb[0].mxu0 %v926
    %v994 = vpop.f32.mrb[0].mxu0
    %v995 = vadd.f32 0.0, %v994
    %v996 = vpop.f32.mrb[0].mxu0
    %997 = vdwg.mxu0
    %v999 = vrot.slane %v995, 2
    %v1001 = vadd.f32 %v150, %v999
    %v1002 = vxor.u32 %v1001, 2147483648
    %v1003 = vmul.f32 %v1002, 1.442695
    %v1004 = vpow.pop %v1003
    %v1005 = vadd.f32 %v1004, 1.0
    %v1006 = vrcp.pop %v1005
    %v1007 = vmul.f32 1.0, %v1006
    %v1008 = vtanh.pop %v1001
    %v1010 = vrot.slane %v911, 6
    %v1012 = vmul.f32 %v1007, %v1010
    %1014 = vrot.lane.b32.xlu0 %v1008, 64
    %v1015 = vpop.permute.xlu0 %1014
    %v1017 = vmul.f32 %v1007, %v1015
    %1019 = vrot.lane.b32.xlu0 %v1017, 32
    %v1020 = vpop.permute.xlu0 %1019
    %v1022 = vadd.f32 %v1012, %v1020
    %v1023 = vtanh.pop %v1022
    %1025 = vrot.lane.b32.xlu0 %v1023, 64
    %v1026 = vpop.permute.xlu0 %1025
    %v1028 = vmul.f32 %v1007, %v1026
    %1030 = vrot.lane.b32.xlu0 %v1028, 32
    %v1031 = vpop.permute.xlu0 %1030
    %1033 = vst.msk [vmem:[#allocation2 + $0x8] sm:$0xc0] %vm594, %v1031
    %v1034 = vrot.slane %v1028, 6
    %1035 = vrot.lane.b32.xlu0 %v1034, 32
    %v1036 = vpop.permute.xlu0 %1035
    %v1037 = vsel %vm158, %v1036, 0
    %1039 = vmatprep.subr.mxu0 0.0
    %1040 = vmatpush1.msra.mxu0 %v52
    %1041 = vmatprep.subr.mxu0 0.0
    %1042 = vmatpush1.msra.mxu0 %v53
    %1043 = vmatprep.subr.mxu0 0.0
    %1044 = vmatpush1.msra.mxu0 %v54
    %1045 = vmatprep.subr.mxu0 0.0
    %1046 = vmatpush1.msra.mxu0 %v55
    %1047 = vmatprep.subr.mxu0 0.0
    %1048 = vmatpush1.msra.mxu0 0.0
    %1049 = vmatprep.subr.mxu0 0.0
    %1050 = vmatpush1.msra.mxu0 0.0
    %1051 = vmatprep.subr.mxu0 0.0
    %1052 = vmatpush1.msra.mxu0 0.0
    %1053 = vmatprep.subr.mxu0 0.0
    %1054 = vmatpush1.msra.mxu0 0.0
    %1055 = vmatprep.subr.mxu0 0.0
    %1056 = vmatpush1.msra.mxu0 0.0
    %1057 = vmatprep.subr.mxu0 0.0
    %1058 = vmatpush1.msra.mxu0 0.0
    %1059 = vmatprep.subr.mxu0 0.0
    %1060 = vmatpush1.msra.mxu0 0.0
    %1061 = vmatprep.subr.mxu0 0.0
    %1062 = vmatpush1.msra.mxu0 0.0
    %1063 = vmatprep.subr.mxu0 0.0
    %1064 = vmatpush1.msra.mxu0 0.0
    %1065 = vmatprep.subr.mxu0 0.0
    %1066 = vmatpush1.msra.mxu0 0.0
    %1067 = vmatprep.subr.mxu0 0.0
    %1068 = vmatpush1.msra.mxu0 0.0
    %1069 = vmatprep.subr.mxu0 0.0
    %1070 = vmatpush1.msra.mxu0 0.0
    %1071 = vmatprep.subr.mxu0 0.0
    %1072 = vmatpush1.msra.mxu0 0.0
    %1073 = vmatprep.subr.mxu0 0.0
    %1074 = vmatpush1.msra.mxu0 0.0
    %1075 = vmatprep.subr.mxu0 0.0
    %1076 = vmatpush1.msra.mxu0 0.0
    %1077 = vmatprep.subr.mxu0 0.0
    %1078 = vmatpush1.msra.mxu0 0.0
    %1079 = vmatprep.subr.mxu0 0.0
    %1080 = vmatpush1.msra.mxu0 0.0
    %1081 = vmatprep.subr.mxu0 0.0
    %1082 = vmatpush1.msra.mxu0 0.0
    %1083 = vmatprep.subr.mxu0 0.0
    %1084 = vmatpush1.msra.mxu0 0.0
    %1085 = vmatprep.subr.mxu0 0.0
    %1086 = vmatpush1.msra.mxu0 0.0
    %1087 = vmatprep.subr.mxu0 0.0
    %1088 = vmatpush1.msra.mxu0 0.0
    %1089 = vmatprep.subr.mxu0 0.0
    %1090 = vmatpush1.msra.mxu0 0.0
    %1091 = vmatprep.subr.mxu0 0.0
    %1092 = vmatpush1.msra.mxu0 0.0
    %1093 = vmatprep.subr.mxu0 0.0
    %1094 = vmatpush1.msra.mxu0 0.0
    %1095 = vmatprep.subr.mxu0 0.0
    %1096 = vmatpush1.msra.mxu0 0.0
    %1097 = vmatprep.subr.mxu0 0.0
    %1098 = vmatpush1.msra.mxu0 0.0
    %1099 = vmatprep.subr.mxu0 0.0
    %1100 = vmatpush1.msra.mxu0 0.0
    %1101 = vmatprep.subr.mxu0 0.0
    %1102 = vmatpush1.msra.mxu0 0.0
    %1103 = vmatprep.mubr.f32.mxu0 0.0
    %1104 = vmatmul.mubr.f32.gmra.mrb[0].mxu0 %v1037
    %v1105 = vpop.f32.mrb[0].mxu0
    %v1106 = vadd.f32 0.0, %v1105
    %v1107 = vpop.f32.mrb[0].mxu0
    %1108 = vdwg.mxu0
    %v1109 = vadd.f32 %v155, %v1106
    %v1110 = vxor.u32 %v1109, 2147483648
    %v1111 = vmul.f32 %v1110, 1.442695
    %v1112 = vpow.pop %v1111
    %v1113 = vadd.f32 %v1112, 1.0
    %v1114 = vrcp.pop %v1113
    %v1115 = vmul.f32 1.0, %v1114
    %v1116 = vtanh.pop %v1109
    %v1118 = vrot.slane %v1022, 6
    %v1120 = vmul.f32 %v1115, %v1118
    %1122 = vrot.lane.b32.xlu0 %v1116, 64
    %v1123 = vpop.permute.xlu0 %1122
    %v1125 = vmul.f32 %v1115, %v1123
    %1127 = vrot.lane.b32.xlu0 %v1125, 32
    %v1128 = vpop.permute.xlu0 %1127
    %v1130 = vadd.f32 %v1120, %v1128
    %v1131 = vtanh.pop %v1130
    %1133 = vrot.lane.b32.xlu0 %v1131, 64
    %v1134 = vpop.permute.xlu0 %1133
    %v1136 = vmul.f32 %v1115, %v1134
    %1138 = vrot.lane.b32.xlu0 %v1136, 32
    %v1139 = vpop.permute.xlu0 %1138
    %1141 = vst.msk [vmem:[#allocation2 + $0x10] sm:$0x3] %vm261, %v1139
    %v1142 = vld [vmem:[#allocation2] sm:$0xff]
    %v1143 = vld [vmem:[#allocation2 + $0x8] sm:$0xff]
    %v1144 = vld [vmem:[#allocation2 + $0x10] sm:$0x3]
    %v1145 = vld [vmem:[#allocation6] sm:$0xff]
    %v1146 = vld [vmem:[#allocation6 + $0x8] sm:$0xff]
    %v1147 = vld [vmem:[#allocation6 + $0x10] sm:$0xff]
    %v1148 = vld [vmem:[#allocation6 + $0x18] sm:$0xff]
    %v1149 = vld [vmem:[%s5] sm:$0x1]
    %v1151 = vlaneseq
    %v1152 = vshrl.u32 %v1151, 7
    %v1153 = vsub.s32 0, %v1152
    %v1154 = vrot.slane %v1149, %v1153
    %v1157 = vsel %vm158, %v1142, 0
    %v1160 = vsel %vm158, %v1143, 0
    %v1163 = vsel %vm158, %v1144, 0
    %1165 = vmatprep.subr.mxu0 0.0
    %1166 = vmatpush1.msra.mxu0 %v1145
    %1167 = vmatprep.subr.mxu0 0.0
    %1168 = vmatpush1.msra.mxu0 %v1146
    %1169 = vmatprep.subr.mxu0 0.0
    %1170 = vmatpush1.msra.mxu0 %v1147
    %1171 = vmatprep.subr.mxu0 0.0
    %1172 = vmatpush1.msra.mxu0 %v1148
    %1173 = vmatprep.subr.mxu0 0.0
    %1174 = vmatpush1.msra.mxu0 0.0
    %1175 = vmatprep.subr.mxu0 0.0
    %1176 = vmatpush1.msra.mxu0 0.0
    %1177 = vmatprep.subr.mxu0 0.0
    %1178 = vmatpush1.msra.mxu0 0.0
    %1179 = vmatprep.subr.mxu0 0.0
    %1180 = vmatpush1.msra.mxu0 0.0
    %1181 = vmatprep.subr.mxu0 0.0
    %1182 = vmatpush1.msra.mxu0 0.0
    %1183 = vmatprep.subr.mxu0 0.0
    %1184 = vmatpush1.msra.mxu0 0.0
    %1185 = vmatprep.subr.mxu0 0.0
    %1186 = vmatpush1.msra.mxu0 0.0
    %1187 = vmatprep.subr.mxu0 0.0
    %1188 = vmatpush1.msra.mxu0 0.0
    %1189 = vmatprep.subr.mxu0 0.0
    %1190 = vmatpush1.msra.mxu0 0.0
    %1191 = vmatprep.subr.mxu0 0.0
    %1192 = vmatpush1.msra.mxu0 0.0
    %1193 = vmatprep.subr.mxu0 0.0
    %1194 = vmatpush1.msra.mxu0 0.0
    %1195 = vmatprep.subr.mxu0 0.0
    %1196 = vmatpush1.msra.mxu0 0.0
    %1197 = vmatprep.subr.mxu0 0.0
    %1198 = vmatpush1.msra.mxu0 0.0
    %1199 = vmatprep.subr.mxu0 0.0
    %1200 = vmatpush1.msra.mxu0 0.0
    %1201 = vmatprep.subr.mxu0 0.0
    %1202 = vmatpush1.msra.mxu0 0.0
    %1203 = vmatprep.subr.mxu0 0.0
    %1204 = vmatpush1.msra.mxu0 0.0
    %1205 = vmatprep.subr.mxu0 0.0
    %1206 = vmatpush1.msra.mxu0 0.0
    %1207 = vmatprep.subr.mxu0 0.0
    %1208 = vmatpush1.msra.mxu0 0.0
    %1209 = vmatprep.subr.mxu0 0.0
    %1210 = vmatpush1.msra.mxu0 0.0
    %1211 = vmatprep.subr.mxu0 0.0
    %1212 = vmatpush1.msra.mxu0 0.0
    %1213 = vmatprep.subr.mxu0 0.0
    %1214 = vmatpush1.msra.mxu0 0.0
    %1215 = vmatprep.subr.mxu0 0.0
    %1216 = vmatpush1.msra.mxu0 0.0
    %1217 = vmatprep.subr.mxu0 0.0
    %1218 = vmatpush1.msra.mxu0 0.0
    %1219 = vmatprep.subr.mxu0 0.0
    %1220 = vmatpush1.msra.mxu0 0.0
    %1221 = vmatprep.subr.mxu0 0.0
    %1222 = vmatpush1.msra.mxu0 0.0
    %1223 = vmatprep.subr.mxu0 0.0
    %1224 = vmatpush1.msra.mxu0 0.0
    %1225 = vmatprep.subr.mxu0 0.0
    %1226 = vmatpush1.msra.mxu0 0.0
    %1227 = vmatprep.subr.mxu0 0.0
    %1228 = vmatpush1.msra.mxu0 0.0
    %1229 = vmatprep.mubr.f32.mxu0 0.0
    %1230 = vmatmul.mubr.f32.gmra.mrb[0].mxu0 %v1157
    %v1231 = vpop.f32.mrb[0].mxu0
    %v1232 = vadd.f32 %v1154, %v1231
    %v1233 = vpop.f32.mrb[0].mxu0
    %1234 = vmatprep.mubr.f32.mxu0 0.0
    %1235 = vmatmul.mubr.f32.gmra.mrb[0].mxu0 %v1160
    %v1236 = vpop.f32.mrb[0].mxu0
    %v1237 = vadd.f32 %v1154, %v1236
    %v1238 = vpop.f32.mrb[0].mxu0
    %1239 = vmatprep.mubr.f32.mxu0 0.0
    %1240 = vmatmul.mubr.f32.gmra.mrb[0].mxu0 %v1163
    %v1241 = vpop.f32.mrb[0].mxu0
    %v1242 = vadd.f32 %v1154, %v1241
    %v1243 = vpop.f32.mrb[0].mxu0
    %1244 = vdwg.mxu0
    %1245 = vst.msk [vmem:[#allocation8] sm:$0xff] %vm158, %v1232
    %1246 = vst.msk [vmem:[#allocation8 + $0x8] sm:$0xff] %vm158, %v1237
    %1247 = vst.msk [vmem:[#allocation8 + $0x10] sm:$0x3] %vm261, %v1242
    // Predicated region
    $region34: #{tpu_custom_call.1} parent=1 // pred_check
      _
    $region35: #{tpu_custom_call.1} parent=1 // pred_check_branch
      %1249 = sbr.rel (0) target = $region37
    $region36: #{tpu_custom_call.1} parent=1 // pred_region
      %s1251 = ssub.s32 384, 384
      %1252 = vsyncadd [#allocation5], %s1251
      %s1253 = sshll.u32 [#allocation8], 4
      %s1254 = int_to_ptr.vmem [resolvable:$true] %s1253
      %1259 = dma.vmem_to_hbm [thread:$0]  %s1254, 384, %s6, [#allocation5], 128, 128, 8
    $region37: #{tpu_custom_call.1} parent=1 // pred_fallthru
      _
    // Predicated region
    $region38: #{tpu_custom_call.1} parent=1 // pred_check
      _
    $region39: #{tpu_custom_call.1} parent=1 // pred_check_branch
      %1261 = sbr.rel (0) target = $region41
    $region40: #{tpu_custom_call.1} parent=1 // pred_region
      %1262 = dma.done [#allocation5], 384
    $region41: #{tpu_custom_call.1} parent=1 // pred_fallthru
      _
    %1263 = vsyncpa [#allocation4], 1
    %1264 = vsyncpa [#allocation7], 1
    %1265 = vsyncpa [#allocation5], 1

</llo_original>
